<compile_context>
chip_gen: v5e
topology: v5e:2x2
jax: 0.10.0
libtpu: 0.0.40
codegen_flags: <defaults>
</compile_context>

<pallas_src>
import jax
import jax.numpy as jnp
from jax import lax
from jax.experimental import pallas as pl
from jax.experimental.pallas import tpu as pltpu

LANE = 128     # vreg lane width  (last-dim tile)
SUBLANE = 8    # vreg sublane width (second-to-last-dim tile, f32)


def _round_up(x, m):
    return (x + m - 1) // m * m


# ----------------------------------------------------------------------------
# Pallas kernel: re-parameterized RepVGG block = 3x3 conv + bias + ReLU
# (single im2col matmul per row-block)
# ----------------------------------------------------------------------------
def _repvgg_kernel(x_hbm, w_ref, b_ref, o_ref, lhs_ref, xbuf, sem):
    """Grid = (N, Hp // TH): one output row-block per step.

    x_hbm   : (N*(Hp+2), Win, Cp)  bf16 in HBM (memory_space=ANY); spatially (1-row/col halo)
                                    and channel padded; flat row index = n*(Hp+2) + r.
    w_ref   : (9*Cp, Coutp)        bf16 fused weights; K row-block p = kh*3 + kw.
    b_ref   : (1, Coutp)           f32 fused bias (b3 + b1 + b_id).
    o_ref   : (1, TH, Wp, Coutp)   bf16 output row-block (Coutp % 128 == 0 -> lane-dense stores).
    lhs_ref : (TH*Wp, 9*Cp)        bf16 im2col scratch (taps folded into the MXU K dim).
    xbuf    : (2, TH+2, Win, Cp)   bf16 VMEM double buffer for the halo'd input rows.
    sem     : (2,)                 DMA semaphores, one per buffer slot.
    """
    n = pl.program_id(0)
    i = pl.program_id(1)
    n_blk = pl.num_programs(1)

    th, wp, coutp = o_ref.shape[1], o_ref.shape[2], o_ref.shape[3]
    cp = xbuf.shape[3]

    slot = i % 2
    rows_per_image = th * n_blk + 2            # padded rows per image in x_hbm
    row0 = n * rows_per_image + i * th         # first halo row of this block

    def _fetch(row_start, s):
        pltpu.make_async_copy(
            x_hbm.at[pl.ds(row_start, th + 2)], xbuf.at[s], sem.at[s]
        ).start()

    # First row-block of an image: nothing was prefetched for us -> fetch now.
    @pl.when(i == 0)
    def _():
        _fetch(row0, slot)

    # Prefetch the next row-block of the SAME image into the other slot
    # (hides the input DMA behind this step's MXU work; chain is per-image,
    # so it stays correct when the batch axis is megacore-partitioned).
    @pl.when(i + 1 < n_blk)
    def _():
        _fetch(row0 + th, 1 - slot)

    # Wait for the current row-block.
    pltpu.make_async_copy(
        x_hbm.at[pl.ds(row0, th + 2)], xbuf.at[slot], sem.at[slot]
    ).wait()

    x_cur = xbuf.at[slot]                      # (TH+2, Win, Cp) view, no copy

    # Build the im2col LHS: lane-block p = kh*3 + kw holds tap (kh, kw).
    # One sublane-shifted materialization per kw (3 total); the kh windows are
    # leading-axis slices of that value (near free); every lhs store is 128-lane aligned.
    for kw in range(3):
        xw = x_cur[:, kw:kw + wp, :]           # (TH+2, Wp, Cp) bf16
        for kh in range(3):
            p = kh * 3 + kw
            lhs_ref[:, p * cp:(p + 1) * cp] = xw[kh:kh + th].reshape(th * wp, cp)

    # Single contraction: all 9 taps accumulate inside the MXU (K = 9*Cp); no VMEM
    # accumulator read-modify-write.  Bias add + ReLU on the f32 result, store bf16.
    acc = jnp.dot(lhs_ref[...], w_ref[...], preferred_element_type=jnp.float32)
    acc = jnp.maximum(acc + b_ref[...], 0.0)
    o_ref[...] = acc.astype(o_ref.dtype).reshape(1, th, wp, coutp)


# ----------------------------------------------------------------------------
# VMEM budgeting (chip-aware)
# ----------------------------------------------------------------------------
def _vmem_capacity_bytes():
    """Per-core VMEM capacity; conservative (v7x-sized) fallback if the query fails."""
    try:
        return int(pltpu.get_tpu_info().vmem_capacity_bytes)
    except Exception:
        return 64 * 1024 * 1024


def _pick_row_block(h, wp, win, cp, coutp, out_bytes, budget_bytes):
    """Largest output row-block whose per-step working set fits `budget_bytes`."""
    fixed = (2 * 9 * cp * coutp * 2        # double-buffered bf16 weight tile
             + 2 * coutp * 4               # bias pipeline buffers
             + 2 * 2 * win * cp * 2)       # the 2 halo rows of both input buffers
    per_row = (2 * win * cp * 2            # 2 x bf16 halo'd input row buffers
               + wp * 9 * cp * 2           # im2col LHS scratch (taps folded into K)
               + wp * cp * 2               # kw-shifted bf16 window temporary
               + wp * coutp * 4            # f32 MXU result / bias+ReLU temporary
               + 2 * wp * coutp * out_bytes)   # 2 x output pipeline buffers
    th = (budget_bytes - fixed) // per_row
    th = max(SUBLANE, th // SUBLANE * SUBLANE)
    return int(min(th, _round_up(h, SUBLANE)))


# ----------------------------------------------------------------------------
# Wrappers
# ----------------------------------------------------------------------------
def repvgg_block_nhwc(x_nhwc, params, *, row_block=None, out_dtype=jnp.bfloat16):
    """Core entry point: NHWC activations in, NHWC `out_dtype` out.  Use this when stacking
    RepVGG blocks so activations stay in the kernel's layout (no NCHW<->NHWC HBM passes).

    x_nhwc : (N, H, W, C).   Returns (N, H, W, Cout) in out_dtype.
    params : {"w": (3, 3, C, Cout) float32 fused HWIO weights,
              "b": (Cout,)         float32 fused bias}   -- see fuse_repvgg_params().
    """
    w_hwio = params["w"]
    bias = params["b"]
    _, _, c_in, c_out = w_hwio.shape
    n, h, w, cx = x_nhwc.shape
    assert cx == c_in, "channel mismatch"

    # Lane/sublane-dense padded geometry.
    cp = _round_up(c_in, LANE)        # MXU K sub-dim + lane-dense input loads
    coutp = _round_up(c_out, LANE)    # MXU N dim + unmasked (lane-dense) output stores
    wp = _round_up(w, 16)             # sublane-friendly output width (bf16 stores)
    win = wp + 8                      # padded input width (>= wp + 2, multiple of 8)
    out_bytes = jnp.dtype(out_dtype).itemsize

    vmem_cap = _vmem_capacity_bytes()
    if row_block is None:
        th = _pick_row_block(h, wp, win, cp, coutp, out_bytes,
                             budget_bytes=int(vmem_cap * 0.55))
    else:
        th = int(row_block)
        assert th >= SUBLANE and th % SUBLANE == 0, "row_block must be a multiple of 8"
    hp = _round_up(h, th)
    n_blk = hp // th

    # Single wrapper pass over the activation: cast bf16, pad halo + alignment + channels.
    x = x_nhwc.astype(jnp.bfloat16)
    x = jnp.pad(x, ((0, 0), (1, hp - h + 1), (1, win - w - 1), (0, cp - c_in)))
    x = x.reshape(n * (hp + 2), win, cp)      # flat row index = n*(hp+2) + r

    # Fold the 3x3 taps into the contraction: (3,3,Cp,Coutp) -> (9*Cp, Coutp);
    # K row-block p = kh*3 + kw matches the kernel's im2col lane-block order.
    wk = jnp.pad(w_hwio, ((0, 0), (0, 0), (0, cp - c_in), (0, coutp - c_out)))
    wk = wk.astype(jnp.bfloat16).reshape(9 * cp, coutp)
    bk = jnp.pad(bias, (0, coutp - c_out)).astype(jnp.float32).reshape(1, coutp)

    flops = 2 * n * hp * wp * 9 * cp * coutp
    bytes_accessed = (x.size * 2 + wk.size * 2 + bk.size * 4
                      + n * hp * wp * coutp * out_bytes)

    out = pl.pallas_call(
        _repvgg_kernel,
        out_shape=jax.ShapeDtypeStruct((n, hp, wp, coutp), out_dtype),
        grid_spec=pltpu.PrefetchScalarGridSpec(
            num_scalar_prefetch=0,
            grid=(n, n_blk),
            in_specs=[
                pl.BlockSpec(memory_space=pl.ANY),                   # x: manual halo DMA
                pl.BlockSpec((9 * cp, coutp), lambda b, i: (0, 0)),  # fused weights
                pl.BlockSpec((1, coutp), lambda b, i: (0, 0)),       # fused bias
            ],
            out_specs=pl.BlockSpec((1, th, wp, coutp), lambda b, i: (b, i, 0, 0)),
            scratch_shapes=[
                pltpu.VMEM((th * wp, 9 * cp), jnp.bfloat16),        # im2col LHS
                pltpu.VMEM((2, th + 2, win, cp), jnp.bfloat16),     # input double buffer
                pltpu.SemaphoreType.DMA((2,)),
            ],
        ),
        compiler_params=pltpu.CompilerParams(
            dimension_semantics=("parallel", "arbitrary"),
            vmem_limit_bytes=int(vmem_cap * 0.85),
        ),
        cost_estimate=pl.CostEstimate(flops=flops, transcendentals=0,
                                      bytes_accessed=bytes_accessed),
    )(x, wk, bk)

    return out[:, :h, :w, :c_out]                      # drop alignment padding


def repvgg_block(x_nchw, params, *, row_block=None):
    """RepVGGBlock forward (eval-mode BN, use_relu=True, use_se=False, stride=1, groups=1).

    x_nchw : (N, C, H, W) float32.   Returns (N, Cout, H, W) float32.
    """
    x = jnp.transpose(x_nchw, (0, 2, 3, 1))
    y = repvgg_block_nhwc(x, params, row_block=row_block, out_dtype=jnp.bfloat16)
    return jnp.transpose(y, (0, 3, 1, 2)).astype(jnp.float32)


# ----------------------------------------------------------------------------
# Parameter construction + exact RepVGG re-parameterization (plain JAX glue)
# ----------------------------------------------------------------------------
def fuse_repvgg_params(raw, eps=1e-5):
    """JAX port of RepVGGBlock._get_equivalent_kernel_bias: fold 3x3+BN, 1x1+BN (padded
    to the center tap) and the identity BN into one 3x3 kernel + bias (eval-mode BN).
    Returns HWIO weights (3, 3, C, Cout) and bias (Cout,)."""
    def conv_bn(w_oihw, p):
        t = p["gamma"] / jnp.sqrt(p["var"] + eps)
        return w_oihw * t[:, None, None, None], p["beta"] - p["mean"] * t

    k3, b3 = conv_bn(raw["w3"], raw["bn3"])
    k1, b1 = conv_bn(raw["w1"], raw["bn1"])
    k = k3 + jnp.pad(k1, ((0, 0), (0, 0), (1, 1), (1, 1)))
    b = b3 + b1
    if raw.get("bnid") is not None:              # only when C == Cout and stride == 1
        p = raw["bnid"]
        t = p["gamma"] / jnp.sqrt(p["var"] + eps)
        c = raw["w3"].shape[1]
        kid = jnp.zeros_like(k3).at[jnp.arange(c), jnp.arange(c), 1, 1].set(t)
        k = k + kid
        b = b + p["beta"] - p["mean"] * t
    return jnp.transpose(k, (2, 3, 1, 0)), b     # OIHW -> HWIO


def make_raw_params(key, in_channels, out_channels):
    """Deterministic synthetic parameters matching RepVGGBlock.__init__ (kernel_size=3,
    stride=1, padding=dilation=1, groups=1).  BN uses eval-mode running statistics."""
    c, co = in_channels, out_channels
    ks = jax.random.split(key, 14)

    def bn(k0, k1, k2, k3, nfeat):
        return dict(
            gamma=jax.random.uniform(k0, (nfeat,), jnp.float32, 0.5, 1.5),
            beta=jax.random.normal(k1, (nfeat,), jnp.float32) * 0.1,
            mean=jax.random.normal(k2, (nfeat,), jnp.float32) * 0.1,
            var=jax.random.uniform(k3, (nfeat,), jnp.float32, 0.5, 1.5),
        )

    return dict(
        w3=jax.random.normal(ks[0], (co, c, 3, 3), jnp.float32) * 0.1,
        bn3=bn(ks[1], ks[2], ks[3], ks[4], co),
        w1=jax.random.normal(ks[5], (co, c, 1, 1), jnp.float32) * 0.1,
        bn1=bn(ks[6], ks[7], ks[8], ks[9], co),
        bnid=bn(ks[10], ks[11], ks[12], ks[13], c) if (c == co) else None,
    )


# ----------------------------------------------------------------------------
# Pure-JAX references
# ----------------------------------------------------------------------------
def reference_module(x_nchw, raw, eps=1e-5):
    """f32 reference of RepVGGBlock.forward (training architecture, eval-mode BN):
    branch_3x3(x) + branch_1x1(x) + no_conv_branch(x), then ReLU."""
    x = jnp.transpose(x_nchw, (0, 2, 3, 1))

    def bn(y, p):
        return (y - p["mean"]) / jnp.sqrt(p["var"] + eps) * p["gamma"] + p["beta"]

    w3 = jnp.transpose(raw["w3"], (2, 3, 1, 0))
    y3 = lax.conv_general_dilated(
        x, w3, window_strides=(1, 1), padding=((1, 1), (1, 1)),
        dimension_numbers=("NHWC", "HWIO", "NHWC"),
        precision=lax.Precision.HIGHEST)
    y3 = bn(y3, raw["bn3"])

    w1 = raw["w1"][:, :, 0, 0].T
    y1 = bn(jnp.einsum("nhwc,co->nhwo", x, w1,
                       precision=lax.Precision.HIGHEST), raw["bn1"])

    yid = bn(x, raw["bnid"]) if raw.get("bnid") is not None else 0.0
    return jnp.transpose(jnp.maximum(y3 + y1 + yid, 0.0), (0, 3, 1, 2))


def reference_fused(x_nchw, w_hwio, bias, dtype=jnp.bfloat16):
    """Single 3x3 conv with the fused weights, in the kernel's arithmetic
    (dtype operands, f32 accumulation)."""
    x = jnp.transpose(x_nchw, (0, 2, 3, 1)).astype(dtype)
    y = lax.conv_general_dilated(
        x, w_hwio.astype(dtype), window_strides=(1, 1), padding=((1, 1), (1, 1)),
        dimension_numbers=("NHWC", "HWIO", "NHWC"),
        preferred_element_type=jnp.float32,
        precision=lax.Precision.HIGHEST)
    y = jnp.maximum(y + bias.astype(jnp.float32), 0.0)
    return jnp.transpose(y, (0, 3, 1, 2))


# ----------------------------------------------------------------------------
if __name__ == "__main__":
    # Small shapes; in_channels == out_channels and stride == 1, so the identity-BN
    # branch is active and all three RepVGG branches are exercised.
    N, C, H, W = 2, 8, 16, 16
    key = jax.random.PRNGKey(0)
    kx, kp = jax.random.split(key)
    x = jax.random.normal(kx, (N, C, H, W), jnp.float32)

    raw = make_raw_params(kp, in_channels=C, out_channels=C)
    w_hwio, bias = fuse_repvgg_params(raw)
    params = {"w": w_hwio, "b": bias}

    # (a) The re-param fold is exact: fused 3x3 conv == 3-branch module forward (f32).
    ref_module = reference_module(x, raw)
    ref_fold = reference_fused(x, w_hwio, bias, dtype=jnp.float32)
    err_fold = float(jnp.max(jnp.abs(ref_fold - ref_module)))
    assert jnp.allclose(ref_fold, ref_module, rtol=1e-3, atol=1e-3), err_fold

    # Kernel-matching reference: bf16 operands, f32 accumulation, bf16 store.
    ref = reference_fused(x, w_hwio, bias, dtype=jnp.bfloat16)
    ref = ref.astype(jnp.bfloat16).astype(jnp.float32)

    # (b) row_block=8 -> 2 row-blocks per image: exercises the halo DMA / double buffering.
    out = jax.block_until_ready(repvgg_block(x, params, row_block=8))
    assert out.shape == (N, C, H, W)
    err_kernel = float(jnp.max(jnp.abs(out - ref)))
    assert jnp.allclose(out, ref, rtol=2e-2, atol=2e-2), err_kernel

    # (c) Auto (chip-aware VMEM budget) row-block path: single block per image.
    out2 = jax.block_until_ready(repvgg_block(x, params))
    err_auto = float(jnp.max(jnp.abs(out2 - ref)))
    assert jnp.allclose(out2, ref, rtol=2e-2, atol=2e-2), err_auto

    print("KERNEL_OK")
</pallas_src>

<mosaic_0001>
module attributes {stable_mosaic.version = 11 : i64} {
  func.func @_repvgg_kernel(%arg0: i32, %arg1: i32, %arg2: memref<36x24x128xbf16, #tpu.memory_space<any>>, %arg3: memref<1152x128xbf16, #tpu.memory_space<vmem>>, %arg4: memref<1x128xf32, #tpu.memory_space<vmem>>, %arg5: memref<1x8x16x128xbf16, #tpu.memory_space<vmem>>, %arg6: memref<128x1152xbf16, #tpu.memory_space<vmem>>, %arg7: memref<2x10x24x128xbf16, #tpu.memory_space<vmem>>, %arg8: memref<2x!tpu.dma_semaphore, #tpu.memory_space<semaphore_mem>>) attributes {dimension_semantics = [#tpu.dimension_semantics<parallel>, #tpu.dimension_semantics<arbitrary>], iteration_bounds = array<i64: 2, 2>, scalar_prefetch = 0 : i64, scratch_operands = 3 : i64, tpu.core_type = #tpu.core_type<tc>, window_params = [{}, {pipeline_mode = #tpu.pipeline_mode<synchronous>, transform_indices = @transform_1, window_bounds = array<i64: 1152, 128>}, {pipeline_mode = #tpu.pipeline_mode<synchronous>, transform_indices = @transform_2, window_bounds = array<i64: 1, 128>}, {transform_indices = @transform_3, window_bounds = array<i64: 1, 8, 16, 128>}]} {
    %c2_i32 = arith.constant 2 : i32
    %c0_i32 = arith.constant 0 : i32
    %0 = arith.cmpi eq, %c2_i32, %c0_i32 : i32
    %c1_i32 = arith.constant 1 : i32
    %1 = arith.select %0, %c1_i32, %c2_i32 : i32
    %2 = arith.remsi %arg1, %1 : i32
    %c0_i32_0 = arith.constant 0 : i32
    %3 = arith.cmpi ne, %2, %c0_i32_0 : i32
    %c0_i32_1 = arith.constant 0 : i32
    %4 = arith.cmpi slt, %2, %c0_i32_1 : i32
    %c0_i32_2 = arith.constant 0 : i32
    %5 = arith.cmpi slt, %1, %c0_i32_2 : i32
    %6 = arith.xori %4, %5 : i1
    %7 = arith.andi %6, %3 : i1
    %8 = arith.addi %2, %1 : i32
    %9 = arith.select %7, %8, %2 : i32
    %c18_i32 = arith.constant 18 : i32
    %10 = arith.muli %arg0, %c18_i32 : i32
    %c8_i32 = arith.constant 8 : i32
    %11 = arith.muli %arg1, %c8_i32 : i32
    %12 = arith.addi %10, %11 : i32
    %c0_i32_3 = arith.constant 0 : i32
    %13 = arith.cmpi eq, %arg1, %c0_i32_3 : i32
    %14 = arith.extui %13 : i1 to i32
    %c0_i32_4 = arith.constant 0 : i32
    %15 = arith.cmpi ne, %14, %c0_i32_4 : i32
    scf.if %15 {
      %c0_i32_49 = arith.constant 0 : i32
      %c0_i32_50 = arith.constant 0 : i32
      %72 = tpu.memref_slice %arg2[%12, %c0_i32_49, %c0_i32_50] : memref<36x24x128xbf16, #tpu.memory_space<any>> -> memref<10x24x128xbf16, #tpu.memory_space<any>>
      %c0_i32_51 = arith.constant 0 : i32
      %c0_i32_52 = arith.constant 0 : i32
      %c0_i32_53 = arith.constant 0 : i32
      %73 = tpu.memref_slice %arg7[%9, %c0_i32_51, %c0_i32_52, %c0_i32_53] : memref<2x10x24x128xbf16, #tpu.memory_space<vmem>> -> memref<1x10x24x128xbf16, #tpu.memory_space<vmem>>
      %74 = tpu.memref_squeeze %73 : memref<1x10x24x128xbf16, #tpu.memory_space<vmem>> -> memref<10x24x128xbf16, #tpu.memory_space<vmem>>
      %75 = tpu.memref_slice %arg8[%9] : memref<2x!tpu.dma_semaphore, #tpu.memory_space<semaphore_mem>> -> memref<1x!tpu.dma_semaphore, #tpu.memory_space<semaphore_mem>>
      %76 = tpu.memref_squeeze %75 : memref<1x!tpu.dma_semaphore, #tpu.memory_space<semaphore_mem>> -> memref<!tpu.dma_semaphore, #tpu.memory_space<semaphore_mem>>
      tpu.enqueue_dma source(%72 : memref<10x24x128xbf16, #tpu.memory_space<any>>) target(%74 : memref<10x24x128xbf16, #tpu.memory_space<vmem>>) target_semaphore(%76 : memref<!tpu.dma_semaphore, #tpu.memory_space<semaphore_mem>>)
    } else {
    }
    %c1_i32_5 = arith.constant 1 : i32
    %16 = arith.addi %arg1, %c1_i32_5 : i32
    %c2_i32_6 = arith.constant 2 : i32
    %17 = arith.cmpi slt, %16, %c2_i32_6 : i32
    %18 = arith.extui %17 : i1 to i32
    %c0_i32_7 = arith.constant 0 : i32
    %19 = arith.cmpi ne, %18, %c0_i32_7 : i32
    scf.if %19 {
      %c8_i32_49 = arith.constant 8 : i32
      %72 = arith.addi %12, %c8_i32_49 : i32
      %c1_i32_50 = arith.constant 1 : i32
      %73 = arith.subi %c1_i32_50, %9 : i32
      %c0_i32_51 = arith.constant 0 : i32
      %c0_i32_52 = arith.constant 0 : i32
      %74 = tpu.memref_slice %arg2[%72, %c0_i32_51, %c0_i32_52] : memref<36x24x128xbf16, #tpu.memory_space<any>> -> memref<10x24x128xbf16, #tpu.memory_space<any>>
      %c0_i32_53 = arith.constant 0 : i32
      %c0_i32_54 = arith.constant 0 : i32
      %c0_i32_55 = arith.constant 0 : i32
      %75 = tpu.memref_slice %arg7[%73, %c0_i32_53, %c0_i32_54, %c0_i32_55] : memref<2x10x24x128xbf16, #tpu.memory_space<vmem>> -> memref<1x10x24x128xbf16, #tpu.memory_space<vmem>>
      %76 = tpu.memref_squeeze %75 : memref<1x10x24x128xbf16, #tpu.memory_space<vmem>> -> memref<10x24x128xbf16, #tpu.memory_space<vmem>>
      %77 = tpu.memref_slice %arg8[%73] : memref<2x!tpu.dma_semaphore, #tpu.memory_space<semaphore_mem>> -> memref<1x!tpu.dma_semaphore, #tpu.memory_space<semaphore_mem>>
      %78 = tpu.memref_squeeze %77 : memref<1x!tpu.dma_semaphore, #tpu.memory_space<semaphore_mem>> -> memref<!tpu.dma_semaphore, #tpu.memory_space<semaphore_mem>>
      tpu.enqueue_dma source(%74 : memref<10x24x128xbf16, #tpu.memory_space<any>>) target(%76 : memref<10x24x128xbf16, #tpu.memory_space<vmem>>) target_semaphore(%78 : memref<!tpu.dma_semaphore, #tpu.memory_space<semaphore_mem>>)
    } else {
    }
    %c0_i32_8 = arith.constant 0 : i32
    %c0_i32_9 = arith.constant 0 : i32
    %20 = tpu.memref_slice %arg2[%12, %c0_i32_8, %c0_i32_9] : memref<36x24x128xbf16, #tpu.memory_space<any>> -> memref<10x24x128xbf16, #tpu.memory_space<any>>
    %c0_i32_10 = arith.constant 0 : i32
    %c0_i32_11 = arith.constant 0 : i32
    %c0_i32_12 = arith.constant 0 : i32
    %21 = tpu.memref_slice %arg7[%9, %c0_i32_10, %c0_i32_11, %c0_i32_12] : memref<2x10x24x128xbf16, #tpu.memory_space<vmem>> -> memref<1x10x24x128xbf16, #tpu.memory_space<vmem>>
    %22 = tpu.memref_squeeze %21 : memref<1x10x24x128xbf16, #tpu.memory_space<vmem>> -> memref<10x24x128xbf16, #tpu.memory_space<vmem>>
    %23 = tpu.memref_slice %arg8[%9] : memref<2x!tpu.dma_semaphore, #tpu.memory_space<semaphore_mem>> -> memref<1x!tpu.dma_semaphore, #tpu.memory_space<semaphore_mem>>
    %24 = tpu.memref_squeeze %23 : memref<1x!tpu.dma_semaphore, #tpu.memory_space<semaphore_mem>> -> memref<!tpu.dma_semaphore, #tpu.memory_space<semaphore_mem>>
    tpu.wait_dma2 semaphore(%24 : memref<!tpu.dma_semaphore, #tpu.memory_space<semaphore_mem>>) src(%20 : memref<10x24x128xbf16, #tpu.memory_space<any>>) dst(%22 : memref<10x24x128xbf16, #tpu.memory_space<vmem>>)
    %c0_i32_13 = arith.constant 0 : i32
    %c0_i32_14 = arith.constant 0 : i32
    %c0_i32_15 = arith.constant 0 : i32
    %25 = tpu.memref_slice %arg7[%9, %c0_i32_13, %c0_i32_14, %c0_i32_15] : memref<2x10x24x128xbf16, #tpu.memory_space<vmem>> -> memref<1x10x24x128xbf16, #tpu.memory_space<vmem>>
    %26 = tpu.memref_squeeze %25 : memref<1x10x24x128xbf16, #tpu.memory_space<vmem>> -> memref<10x24x128xbf16, #tpu.memory_space<vmem>>
    %c0 = arith.constant 0 : index
    %c0_16 = arith.constant 0 : index
    %c0_17 = arith.constant 0 : index
    %27 = vector.load %26[%c0, %c0_16, %c0_17] : memref<10x24x128xbf16, #tpu.memory_space<vmem>>, vector<10x16x128xbf16>
    %28 = vector.extract_strided_slice %27 {offsets = [0, 0, 0], sizes = [8, 16, 128], strides = [1, 1, 1]} : vector<10x16x128xbf16> to vector<8x16x128xbf16>
    %29 = vector.shape_cast %28 : vector<8x16x128xbf16> to vector<128x128xbf16>
    %c0_18 = arith.constant 0 : index
    %c0_19 = arith.constant 0 : index
    %30 = vector.load %arg6[%c0_18, %c0_19] : memref<128x1152xbf16, #tpu.memory_space<vmem>>, vector<128x128xbf16>
    tpu.vector_store %arg6[%c0_18, %c0_19], %29 {strides = array<i32>} : memref<128x1152xbf16, #tpu.memory_space<vmem>>, vector<128x128xbf16>,
    %31 = vector.extract_strided_slice %27 {offsets = [1, 0, 0], sizes = [8, 16, 128], strides = [1, 1, 1]} : vector<10x16x128xbf16> to vector<8x16x128xbf16>
    %32 = vector.shape_cast %31 : vector<8x16x128xbf16> to vector<128x128xbf16>
    %c0_20 = arith.constant 0 : index
    %c384 = arith.constant 384 : index
    %33 = vector.load %arg6[%c0_20, %c384] : memref<128x1152xbf16, #tpu.memory_space<vmem>>, vector<128x128xbf16>
    tpu.vector_store %arg6[%c0_20, %c384], %32 {strides = array<i32>} : memref<128x1152xbf16, #tpu.memory_space<vmem>>, vector<128x128xbf16>,
    %34 = vector.extract_strided_slice %27 {offsets = [2, 0, 0], sizes = [8, 16, 128], strides = [1, 1, 1]} : vector<10x16x128xbf16> to vector<8x16x128xbf16>
    %35 = vector.shape_cast %34 : vector<8x16x128xbf16> to vector<128x128xbf16>
    %c0_21 = arith.constant 0 : index
    %c768 = arith.constant 768 : index
    %36 = vector.load %arg6[%c0_21, %c768] : memref<128x1152xbf16, #tpu.memory_space<vmem>>, vector<128x128xbf16>
    tpu.vector_store %arg6[%c0_21, %c768], %35 {strides = array<i32>} : memref<128x1152xbf16, #tpu.memory_space<vmem>>, vector<128x128xbf16>,
    %c0_i32_22 = arith.constant 0 : i32
    %c0_i32_23 = arith.constant 0 : i32
    %c0_i32_24 = arith.constant 0 : i32
    %37 = tpu.memref_slice %arg7[%9, %c0_i32_22, %c0_i32_23, %c0_i32_24] : memref<2x10x24x128xbf16, #tpu.memory_space<vmem>> -> memref<1x10x24x128xbf16, #tpu.memory_space<vmem>>
    %38 = tpu.memref_squeeze %37 : memref<1x10x24x128xbf16, #tpu.memory_space<vmem>> -> memref<10x24x128xbf16, #tpu.memory_space<vmem>>
    %c0_25 = arith.constant 0 : index
    %c1 = arith.constant 1 : index
    %c0_26 = arith.constant 0 : index
    %39 = vector.load %38[%c0_25, %c1, %c0_26] : memref<10x24x128xbf16, #tpu.memory_space<vmem>>, vector<10x16x128xbf16>
    %40 = vector.extract_strided_slice %39 {offsets = [0, 0, 0], sizes = [8, 16, 128], strides = [1, 1, 1]} : vector<10x16x128xbf16> to vector<8x16x128xbf16>
    %41 = vector.shape_cast %40 : vector<8x16x128xbf16> to vector<128x128xbf16>
    %c0_27 = arith.constant 0 : index
    %c128 = arith.constant 128 : index
    %42 = vector.load %arg6[%c0_27, %c128] : memref<128x1152xbf16, #tpu.memory_space<vmem>>, vector<128x128xbf16>
    tpu.vector_store %arg6[%c0_27, %c128], %41 {strides = array<i32>} : memref<128x1152xbf16, #tpu.memory_space<vmem>>, vector<128x128xbf16>,
    %43 = vector.extract_strided_slice %39 {offsets = [1, 0, 0], sizes = [8, 16, 128], strides = [1, 1, 1]} : vector<10x16x128xbf16> to vector<8x16x128xbf16>
    %44 = vector.shape_cast %43 : vector<8x16x128xbf16> to vector<128x128xbf16>
    %c0_28 = arith.constant 0 : index
    %c512 = arith.constant 512 : index
    %45 = vector.load %arg6[%c0_28, %c512] : memref<128x1152xbf16, #tpu.memory_space<vmem>>, vector<128x128xbf16>
    tpu.vector_store %arg6[%c0_28, %c512], %44 {strides = array<i32>} : memref<128x1152xbf16, #tpu.memory_space<vmem>>, vector<128x128xbf16>,
    %46 = vector.extract_strided_slice %39 {offsets = [2, 0, 0], sizes = [8, 16, 128], strides = [1, 1, 1]} : vector<10x16x128xbf16> to vector<8x16x128xbf16>
    %47 = vector.shape_cast %46 : vector<8x16x128xbf16> to vector<128x128xbf16>
    %c0_29 = arith.constant 0 : index
    %c896 = arith.constant 896 : index
    %48 = vector.load %arg6[%c0_29, %c896] : memref<128x1152xbf16, #tpu.memory_space<vmem>>, vector<128x128xbf16>
    tpu.vector_store %arg6[%c0_29, %c896], %47 {strides = array<i32>} : memref<128x1152xbf16, #tpu.memory_space<vmem>>, vector<128x128xbf16>,
    %c0_i32_30 = arith.constant 0 : i32
    %c0_i32_31 = arith.constant 0 : i32
    %c0_i32_32 = arith.constant 0 : i32
    %49 = tpu.memref_slice %arg7[%9, %c0_i32_30, %c0_i32_31, %c0_i32_32] : memref<2x10x24x128xbf16, #tpu.memory_space<vmem>> -> memref<1x10x24x128xbf16, #tpu.memory_space<vmem>>
    %50 = tpu.memref_squeeze %49 : memref<1x10x24x128xbf16, #tpu.memory_space<vmem>> -> memref<10x24x128xbf16, #tpu.memory_space<vmem>>
    %c0_33 = arith.constant 0 : index
    %c2 = arith.constant 2 : index
    %c0_34 = arith.constant 0 : index
    %51 = vector.load %50[%c0_33, %c2, %c0_34] : memref<10x24x128xbf16, #tpu.memory_space<vmem>>, vector<10x16x128xbf16>
    %52 = vector.extract_strided_slice %51 {offsets = [0, 0, 0], sizes = [8, 16, 128], strides = [1, 1, 1]} : vector<10x16x128xbf16> to vector<8x16x128xbf16>
    %53 = vector.shape_cast %52 : vector<8x16x128xbf16> to vector<128x128xbf16>
    %c0_35 = arith.constant 0 : index
    %c256 = arith.constant 256 : index
    %54 = vector.load %arg6[%c0_35, %c256] : memref<128x1152xbf16, #tpu.memory_space<vmem>>, vector<128x128xbf16>
    tpu.vector_store %arg6[%c0_35, %c256], %53 {strides = array<i32>} : memref<128x1152xbf16, #tpu.memory_space<vmem>>, vector<128x128xbf16>,
    %55 = vector.extract_strided_slice %51 {offsets = [1, 0, 0], sizes = [8, 16, 128], strides = [1, 1, 1]} : vector<10x16x128xbf16> to vector<8x16x128xbf16>
    %56 = vector.shape_cast %55 : vector<8x16x128xbf16> to vector<128x128xbf16>
    %c0_36 = arith.constant 0 : index
    %c640 = arith.constant 640 : index
    %57 = vector.load %arg6[%c0_36, %c640] : memref<128x1152xbf16, #tpu.memory_space<vmem>>, vector<128x128xbf16>
    tpu.vector_store %arg6[%c0_36, %c640], %56 {strides = array<i32>} : memref<128x1152xbf16, #tpu.memory_space<vmem>>, vector<128x128xbf16>,
    %58 = vector.extract_strided_slice %51 {offsets = [2, 0, 0], sizes = [8, 16, 128], strides = [1, 1, 1]} : vector<10x16x128xbf16> to vector<8x16x128xbf16>
    %59 = vector.shape_cast %58 : vector<8x16x128xbf16> to vector<128x128xbf16>
    %c0_37 = arith.constant 0 : index
    %c1024 = arith.constant 1024 : index
    %60 = vector.load %arg6[%c0_37, %c1024] : memref<128x1152xbf16, #tpu.memory_space<vmem>>, vector<128x128xbf16>
    tpu.vector_store %arg6[%c0_37, %c1024], %59 {strides = array<i32>} : memref<128x1152xbf16, #tpu.memory_space<vmem>>, vector<128x128xbf16>,
    %c0_38 = arith.constant 0 : index
    %c0_39 = arith.constant 0 : index
    %61 = vector.load %arg6[%c0_38, %c0_39] : memref<128x1152xbf16, #tpu.memory_space<vmem>>, vector<128x1152xbf16>
    %c0_40 = arith.constant 0 : index
    %c0_41 = arith.constant 0 : index
    %62 = vector.load %arg3[%c0_40, %c0_41] : memref<1152x128xbf16, #tpu.memory_space<vmem>>, vector<1152x128xbf16>
    %cst = arith.constant dense<0.000000e+00> : vector<128x128xf32>
    %63 = tpu.matmul %61, %62, %cst {dimension_numbers = #tpu.dot_dimension_numbers<[1], [0], [0], [1], [0, 0, 1, 1], [], []>} : vector<128x1152xbf16>, vector<1152x128xbf16>, vector<128x128xf32> -> vector<128x128xf32>
    %c0_42 = arith.constant 0 : index
    %c0_43 = arith.constant 0 : index
    %64 = vector.load %arg4[%c0_42, %c0_43] : memref<1x128xf32, #tpu.memory_space<vmem>>, vector<1x128xf32>
    %65 = vector.broadcast %64 : vector<1x128xf32> to vector<128x128xf32>
    %66 = arith.addf %63, %65 : vector<128x128xf32>
    %cst_44 = arith.constant 0.000000e+00 : f32
    %67 = vector.broadcast %cst_44 : f32 to vector<128x128xf32>
    %68 = arith.maximumf %66, %67 : vector<128x128xf32>
    %69 = arith.truncf %68 : vector<128x128xf32> to vector<128x128xbf16>
    %70 = vector.shape_cast %69 : vector<128x128xbf16> to vector<1x8x16x128xbf16>
    %c0_45 = arith.constant 0 : index
    %c0_46 = arith.constant 0 : index
    %c0_47 = arith.constant 0 : index
    %c0_48 = arith.constant 0 : index
    %71 = vector.load %arg5[%c0_45, %c0_46, %c0_47, %c0_48] : memref<1x8x16x128xbf16, #tpu.memory_space<vmem>>, vector<1x8x16x128xbf16>
    tpu.vector_store %arg5[%c0_45, %c0_46, %c0_47, %c0_48], %70 {strides = array<i32>} : memref<1x8x16x128xbf16, #tpu.memory_space<vmem>>, vector<1x8x16x128xbf16>,
    return
  }
  func.func @transform_1(%arg0: i32, %arg1: i32) -> (i32, i32) {
    %c0_i32 = arith.constant 0 : i32
    %c0_i32_0 = arith.constant 0 : i32
    %c0_i32_1 = arith.constant 0 : i32
    return %c0_i32, %c0_i32_0 : i32, i32
  }
  func.func @transform_2(%arg0: i32, %arg1: i32) -> (i32, i32) {
    %c0_i32 = arith.constant 0 : i32
    %c0_i32_0 = arith.constant 0 : i32
    %c0_i32_1 = arith.constant 0 : i32
    return %c0_i32, %c0_i32_0 : i32, i32
  }
  func.func @transform_3(%arg0: i32, %arg1: i32) -> (i32, i32, i32, i32) {
    %c0_i32 = arith.constant 0 : i32
    %c0_i32_0 = arith.constant 0 : i32
    %c0_i32_1 = arith.constant 0 : i32
    return %arg0, %arg1, %c0_i32, %c0_i32_0 : i32, i32, i32, i32
  }
}

</mosaic_0001>

<llo_original>
// kernel: tpu_custom_call.1
$region0: #{tpu_custom_call.1}
  #allocation0 [shape = 'u32[]', space=smem, size = 0x4, offset = 0x4, fixed_abs, tag = 'smem constant byte address 0x4 - core index']
  #allocation1 [shape = 'u32[72,128]{1,0:T(1,128)}', space=vmem, size = 0x9000, scoped, tag = 'internal scratch']
  #allocation2 [shape = 'bf16[128,1152]{1,0:T(8,128)(2,1)}', space=vmem, size = 0x48000, scoped, tag = 'scratch operand']
  #allocation3 [shape = 'bf16[2,10,24,128]{3,2,1,0:T(8,128)(2,1)}', space=vmem, size = 0x1e000, scoped, tag = 'scratch operand']
  #allocation4 [shape = 's32[2]{0}', space=sflag, size = 0x8, scoped, tag = 'scratch operand']
  #allocation9 [shape = 's32[]', space=sflag, size = 0x4, offset = 0, fixed_abs, tag = 'sflag constant byte address 0x0 - dummy sync flag']
  #allocation10 [shape = 's32[]', space=sflag, size = 0x4, offset = 0, fixed_abs, tag = 'sflag constant byte address 0x0 - dummy sync flag']
  #allocation11 [shape = 'u32[]', space=smem, size = 0x4, offset = 0x44, fixed_abs, tag = 'smem constant byte address 0x44 - assertion arg 0']
  #allocation12 [shape = 'u32[]', space=smem, size = 0x4, offset = 0x48, fixed_abs, tag = 'smem constant byte address 0x48 - assertion arg 1']
  #allocation13 [shape = 's32[]', space=sflag, size = 0x4, offset = 0, fixed_abs, tag = 'sflag constant byte address 0x0 - dummy sync flag']
  #allocation14 [shape = 's32[]', space=sflag, size = 0x4, offset = 0, fixed_abs, tag = 'sflag constant byte address 0x0 - dummy sync flag']
  %s0 = inlined_call_operand.hbm [shape: bf16[36,24,128], index: 0, kind: input, shape index: {}]
  %s1 = inlined_call_operand.hbm [shape: bf16[1152,128], index: 1, kind: input, shape index: {}]
  %s2 = inlined_call_operand.vmem [shape: f32[1,128], index: 2, kind: input, shape index: {}]
  %s3 = inlined_call_operand.hbm [shape: bf16[2,16,16,128], index: 3, kind: output, shape index: {}]
  %s4 = sld [smem:[#allocation0]]
  $region61: #{tpu_custom_call.1} parent=0
    _
  %s6 = ssub.s32 1, %s4
  %s7 = scalar_select 0, %s6, %s4
  $region1: #{tpu_custom_call.1} parent=0
    #allocation5 [shape = 'u8[294912]{0}', space=vmem, size = 0x48000, scoped, tag = 'input window, operand 1, single buffered']
    #allocation6 [shape = 's32[2]{0}', space=sflag, size = 0x8, scoped, tag = 'scoped memory for tpu_custom_call.1']
    #allocation7 [shape = 's32[2]{0}', space=sflag, size = 0x8, scoped, tag = 'scoped memory for tpu_custom_call.1']
    #allocation8 [shape = 'u8[65536]{0}', space=vmem, size = 0x10000, scoped, tag = 'output window, operand 0']
    %8 = vsyncpa [#allocation6], 0
    %9 = vsyncpa [#allocation7], 0
    %s10 = scalar_lea.sflag [#allocation7], 1
    %11 = vsyncpa %s10, 0
    loop: start=0, step=1, limit=6
    $region2: #{tpu_custom_call.1} parent=1 // loop_pre_header
      _
    $region3: #{tpu_custom_call.1} parent=1 // loop_header
      %s13 = sphi 0, %s17
      %p14 = scmp.ge.s32.totalorder %s13, 6
      %s20 = sphi 0, %s32
      %s21 = sphi 0, %s28
      %s22 = sphi 0, %s20
      %s23 = sphi 0, %s21
      %s24 = sphi 0, %s22
      %s25 = sphi 0, %s23
      %s33 = sphi 0, %s33
      %s35 = sphi 0, %s33
      %s36 = sphi 0, %s35
      %s50 = sphi 0, %s36
      %s54 = sphi 0, %s54
      %s56 = sphi 0, %s54
      %s57 = sphi 0, %s56
      %s71 = sphi 0, %s57
      %s79 = sphi 0, %s81
      %s82 = sphi 0, %s79
      %s83 = sphi 0, %s82
      %s99 = sphi 0, %s83
    $region4: #{tpu_custom_call.1} parent=1 // loop_header_branch
      %16 = sbr.rel (%p14) target = $region8
    $region5: #{tpu_custom_call.1} parent=1 // loop_body
      %s18 = ssub.s32 %s13, 1
      %s19 = ssub.s32 %s13, 2
      %s26 = sadd.s32 1, %s21
      %p27 = scmp.ge.s32.totalorder %s26, 2
      %s28 = scalar_select %p27, 0, %s26
      %s29 = sadd.s32 1, %s20
      %s30 = scalar_select %p27, %s29, %s20
      %p31 = scmp.ge.s32.totalorder %s30, 2
      %s32 = scalar_select %p31, 0, %s30
      %s34 = sadd.s32 %s33, 1
      %p37 = scmp.eq.s32.totalorder %s13, 3
      %p38 = scmp.ne.s32.totalorder %s33, %s35
      %p39 = scmp.eq.s32.totalorder %s13, 0
      %p40 = por %p38, %p39
      %p41 = scmp.ne.s32.totalorder %s33, %s35
      %p42 = scmp.eq.s32.totalorder %s18, 3
      %p43 = por %p41, %p42
      %p44 = scmp.ne.s32.totalorder %s35, %s36
      %p45 = scmp.eq.s32.totalorder %s18, 0
      %p46 = por %p44, %p45
      %p47 = scmp.ne.s32.totalorder %s35, %s36
      %p48 = scmp.eq.s32.totalorder %s19, 3
      %p49 = por %p47, %p48
      %p51 = scmp.ne.s32.totalorder %s36, %s50
      %p52 = scmp.eq.s32.totalorder %s19, 0
      %p53 = por %p51, %p52
      %s55 = sadd.s32 %s54, 1
      %p58 = scmp.eq.s32.totalorder %s13, 3
      %p59 = scmp.ne.s32.totalorder %s54, %s56
      %p60 = scmp.eq.s32.totalorder %s13, 0
      %p61 = por %p59, %p60
      %p62 = scmp.ne.s32.totalorder %s54, %s56
      %p63 = scmp.eq.s32.totalorder %s18, 3
      %p64 = por %p62, %p63
      %p65 = scmp.ne.s32.totalorder %s56, %s57
      %p66 = scmp.eq.s32.totalorder %s18, 0
      %p67 = por %p65, %p66
      %p68 = scmp.ne.s32.totalorder %s56, %s57
      %p69 = scmp.eq.s32.totalorder %s19, 3
      %p70 = por %p68, %p69
      %p72 = scmp.ne.s32.totalorder %s57, %s71
      %p73 = scmp.eq.s32.totalorder %s19, 0
      %p74 = por %p72, %p73
      %s75 = ssub.s32 %s20, %s32
      %s76 = ssub.s32 %s21, %s28
      %s77 = sor.u32 %s75, %s76
      %p78 = scmp.eq.s32.totalorder %s77, 0
      %s80 = sadd.s32 %s79, 1
      %s81 = scalar_select %p78, %s79, %s80
      %p84 = pneg %p78
      %p85 = scmp.eq.s32.totalorder %s13, 3
      %p86 = por %p84, %p85
      %p87 = scmp.ne.s32.totalorder %s79, %s82
      %p88 = scmp.eq.s32.totalorder %s13, 0
      %p89 = por %p87, %p88
      %p90 = scmp.ne.s32.totalorder %s79, %s82
      %p91 = scmp.eq.s32.totalorder %s18, 3
      %p92 = por %p90, %p91
      %p93 = scmp.ne.s32.totalorder %s82, %s83
      %p94 = scmp.eq.s32.totalorder %s18, 0
      %p95 = por %p93, %p94
      %p96 = scmp.ne.s32.totalorder %s82, %s83
      %p97 = scmp.eq.s32.totalorder %s19, 3
      %p98 = por %p96, %p97
      %p100 = scmp.ne.s32.totalorder %s83, %s99
      %p101 = scmp.eq.s32.totalorder %s19, 0
      %p102 = por %p100, %p101
      %p103 = scmp.le.s32.totalorder 1, %s13
      %p104 = scmp.lt.s32.totalorder %s13, 5
      %p105 = pnand %p103, %p104
      %p106 = pneg %p105
      // Predicated region
      $region9: #{tpu_custom_call.1} parent=5 // pred_check
        _
      $region10: #{tpu_custom_call.1} parent=5 // pred_check_branch
        %108 = sbr.rel (%p105) target = $region12
      $region11: #{tpu_custom_call.1} parent=5 // pred_region
        %s109 = ssub.s32 %s13, 1
        // Predicated region
        $region13: #{tpu_custom_call.1} parent=11 // pred_check
          %p110 = pneg %p46
        $region14: #{tpu_custom_call.1} parent=11 // pred_check_branch
          %112 = sbr.rel (%p110) target = $region16
        $region15: #{tpu_custom_call.1} parent=11 // pred_region
          %114 = vsyncadd [#allocation6], 0
          %s115 = sshll.u32 %s1, 4
          %s116 = int_to_ptr.hbm [resolvable:$true] %s115
          %s117 = sshll.u32 [#allocation5], 4
          %s118 = int_to_ptr.vmem [resolvable:$true] %s117
          %123 = dma.hbm_to_vmem [thread:$0]  %s116, 9216, %s118, [#allocation6], 64, 64, 4
        $region16: #{tpu_custom_call.1} parent=11 // pred_fallthru
          _
        // Predicated region
        $region17: #{tpu_custom_call.1} parent=11 // pred_check
          %p124 = pneg %p67
        $region18: #{tpu_custom_call.1} parent=11 // pred_check_branch
          %126 = sbr.rel (%p124) target = $region20
        $region19: #{tpu_custom_call.1} parent=11 // pred_region
          _
        $region20: #{tpu_custom_call.1} parent=11 // pred_fallthru
          _
      $region12: #{tpu_custom_call.1} parent=5 // pred_fallthru
        _
      %p127 = scmp.lt.s32.totalorder %s13, 4
      // Predicated region
      $region21: #{tpu_custom_call.1} parent=5 // pred_check
        %p128 = pneg %p127
      $region22: #{tpu_custom_call.1} parent=5 // pred_check_branch
        %130 = sbr.rel (%p128) target = $region24
      $region23: #{tpu_custom_call.1} parent=5 // pred_region
        _
      $region24: #{tpu_custom_call.1} parent=5 // pred_fallthru
        _
      %p131 = scmp.le.s32.totalorder 1, %s13
      %p132 = scmp.lt.s32.totalorder %s13, 5
      %p133 = pnand %p131, %p132
      %p134 = pneg %p133
      // Predicated region
      $region25: #{tpu_custom_call.1} parent=5 // pred_check
        _
      $region26: #{tpu_custom_call.1} parent=5 // pred_check_branch
        %136 = sbr.rel (%p133) target = $region28
      $region27: #{tpu_custom_call.1} parent=5 // pred_region
        %s137 = ssub.s32 %s13, 1
        // Predicated region
        $region29: #{tpu_custom_call.1} parent=27 // pred_check
          %p138 = pneg %p46
        $region30: #{tpu_custom_call.1} parent=27 // pred_check_branch
          %140 = sbr.rel (%p138) target = $region32
        $region31: #{tpu_custom_call.1} parent=27 // pred_region
          %142 = dma.done [#allocation6], 9216
        $region32: #{tpu_custom_call.1} parent=27 // pred_fallthru
          _
        %p143 = pneg %p46
        %p144 = pneg %p43
        %p145 = pneg %p67
        %p146 = pneg %p64
        %p147 = pneg %p95
        %p148 = pneg %p92
        %s149 = sand.u32 %s82, 1
        %s150 = scalar_lea.sflag [#allocation7], %s149
        %s151 = sand.u32 %s82, 1
        %s152 = smul.addr %s151, 64
        %s153 = scalar_lea.vmem [#allocation8], %s152
        %s154 = smul.u32 8, %s23
        %p155 = scmp.lt.s32.totalorder %s23, 0
        %s156 = ssub.s32 0, %s23
        %s157 = scalar_select %p155, %s156, %s23
        %s158 = sand.u32 %s157, 1
        %s159 = ssub.s32 0, %s158
        %s160 = scalar_select %p155, %s159, %s158
        %p161 = scmp.ne.s32.totalorder %s160, 0
        %p162 = scmp.lt.s32.totalorder %s160, 0
        %p163 = pnand %p162, %p161
        %p164 = pneg %p163
        %s165 = sadd.s32 %s160, 2
        %s166 = scalar_select %p164, %s165, %s160
        %s167 = smul.u32 %s22, 18
        %s168 = smul.u32 %s23, 8
        %s169 = sadd.s32 %s167, %s168
        %p170 = scmp.eq.s32.totalorder %s23, 0
        // Predicated region
        $region33: #{tpu_custom_call.1} parent=27 // pred_check
          %p171 = pneg %p170
        $region34: #{tpu_custom_call.1} parent=27 // pred_check_branch
          %173 = sbr.rel (%p171) target = $region36
        $region35: #{tpu_custom_call.1} parent=27 // pred_region
          %s174 = smul.u32 %s169, 3
          %s175 = smul.addr %s174, 4
          %s176 = scalar_lea.hbm %s0, %s175
          %s177 = smul.u32 %s166, 30
          %s178 = smul.addr %s177, 4
          %s179 = scalar_lea.vmem [#allocation3], %s178
          %s180 = scalar_lea.sflag [#allocation4], %s166
          // Predicated region
          $region37: #{tpu_custom_call.1} parent=35 // pred_check
            _
          $region38: #{tpu_custom_call.1} parent=35 // pred_check_branch
            %182 = sbr.rel target = $region40
          $region39: #{tpu_custom_call.1} parent=35 // pred_region
            %183 = sst [smem:[#allocation11]] [#allocation10]
            %184 = sst [smem:[#allocation12]] [#allocation9]
          $region40: #{tpu_custom_call.1} parent=35 // pred_fallthru
            _
          %186 = shalt.err (0)
          %s188 = sshll.u32 %s176, 4
          %s189 = int_to_ptr.hbm [resolvable:$true] %s188
          %s190 = sshll.u32 %s179, 4
          %s191 = int_to_ptr.vmem [resolvable:$true] %s190
          %193 = dma.hbm_to_vmem [thread:$0]  %s189, 1920, %s191, %s180
        $region36: #{tpu_custom_call.1} parent=27 // pred_fallthru
          _
        %s194 = sadd.s32 %s23, 1
        %p195 = scmp.lt.s32.totalorder %s194, 2
        // Predicated region
        $region41: #{tpu_custom_call.1} parent=27 // pred_check
          %p196 = pneg %p195
        $region42: #{tpu_custom_call.1} parent=27 // pred_check_branch
          %198 = sbr.rel (%p196) target = $region44
        $region43: #{tpu_custom_call.1} parent=27 // pred_region
          %s199 = sadd.s32 %s169, 8
          %s200 = ssub.s32 1, %s166
          %s201 = smul.u32 %s199, 3
          %s202 = smul.addr %s201, 4
          %s203 = scalar_lea.hbm %s0, %s202
          %s204 = smul.u32 %s200, 30
          %s205 = smul.addr %s204, 4
          %s206 = scalar_lea.vmem [#allocation3], %s205
          %s207 = scalar_lea.sflag [#allocation4], %s200
          // Predicated region
          $region45: #{tpu_custom_call.1} parent=43 // pred_check
            _
          $region46: #{tpu_custom_call.1} parent=43 // pred_check_branch
            %209 = sbr.rel target = $region48
          $region47: #{tpu_custom_call.1} parent=43 // pred_region
            %210 = sst [smem:[#allocation11]] [#allocation14]
            %211 = sst [smem:[#allocation12]] [#allocation13]
          $region48: #{tpu_custom_call.1} parent=43 // pred_fallthru
            _
          %213 = shalt.err (0)
          %s215 = sshll.u32 %s203, 4
          %s216 = int_to_ptr.hbm [resolvable:$true] %s215
          %s217 = sshll.u32 %s206, 4
          %s218 = int_to_ptr.vmem [resolvable:$true] %s217
          %220 = dma.hbm_to_vmem [thread:$0]  %s216, 1920, %s218, %s207
        $region44: #{tpu_custom_call.1} parent=27 // pred_fallthru
          _
        %s221 = smul.u32 %s166, 30
        %s222 = smul.addr %s221, 4
        %s223 = scalar_lea.vmem [#allocation3], %s222
        %s224 = scalar_lea.sflag [#allocation4], %s166
        %s225 = smul.u32 4, 10
        %s226 = smul.u32 %s225, 3
        %s227 = smul.u32 %s226, 1
        %s228 = sshll.u32 %s227, 4
        %229 = dma.done %s224, %s228
        %v230 = vld [vmem:[%s223] sm:$0xf]
        %v231 = vld [vmem:[%s223 + $0x4] sm:$0xf]
        %v232 = vld [vmem:[%s223 + $0xc] sm:$0xf]
        %v233 = vld [vmem:[%s223 + $0x10] sm:$0xf]
        %v234 = vld [vmem:[%s223 + $0x18] sm:$0xf]
        %v235 = vld [vmem:[%s223 + $0x1c] sm:$0xf]
        %v236 = vld [vmem:[%s223 + $0x24] sm:$0xf]
        %v237 = vld [vmem:[%s223 + $0x28] sm:$0xf]
        %v238 = vld [vmem:[%s223 + $0x30] sm:$0xf]
        %v239 = vld [vmem:[%s223 + $0x34] sm:$0xf]
        %v240 = vld [vmem:[%s223 + $0x3c] sm:$0xf]
        %v241 = vld [vmem:[%s223 + $0x40] sm:$0xf]
        %v242 = vld [vmem:[%s223 + $0x48] sm:$0xf]
        %v243 = vld [vmem:[%s223 + $0x4c] sm:$0xf]
        %v244 = vld [vmem:[%s223 + $0x54] sm:$0xf]
        %v245 = vld [vmem:[%s223 + $0x58] sm:$0xf]
        %v246 = vld [vmem:[%s223 + $0x60] sm:$0xf]
        %v247 = vld [vmem:[%s223 + $0x64] sm:$0xf]
        %v248 = vld [vmem:[%s223 + $0x6c] sm:$0xf]
        %v249 = vld [vmem:[%s223 + $0x70] sm:$0xf]
        %250 = vst [vmem:[#allocation2] sm:$0xf] %v230
        %251 = vst [vmem:[#allocation2 + $0x24] sm:$0xf] %v231
        %252 = vst [vmem:[#allocation2 + $0x48] sm:$0xf] %v232
        %253 = vst [vmem:[#allocation2 + $0x6c] sm:$0xf] %v233
        %254 = vst [vmem:[#allocation2 + $0x90] sm:$0xf] %v234
        %255 = vst [vmem:[#allocation2 + $0xb4] sm:$0xf] %v235
        %256 = vst [vmem:[#allocation2 + $0xd8] sm:$0xf] %v236
        %257 = vst [vmem:[#allocation2 + $0xfc] sm:$0xf] %v237
        %258 = vst [vmem:[#allocation2 + $0x120] sm:$0xf] %v238
        %259 = vst [vmem:[#allocation2 + $0x144] sm:$0xf] %v239
        %260 = vst [vmem:[#allocation2 + $0x168] sm:$0xf] %v240
        %261 = vst [vmem:[#allocation2 + $0x18c] sm:$0xf] %v241
        %262 = vst [vmem:[#allocation2 + $0x1b0] sm:$0xf] %v242
        %263 = vst [vmem:[#allocation2 + $0x1d4] sm:$0xf] %v243
        %264 = vst [vmem:[#allocation2 + $0x1f8] sm:$0xf] %v244
        %265 = vst [vmem:[#allocation2 + $0x21c] sm:$0xf] %v245
        %266 = vst [vmem:[#allocation2 + $0xc] sm:$0xf] %v232
        %267 = vst [vmem:[#allocation2 + $0x30] sm:$0xf] %v233
        %268 = vst [vmem:[#allocation2 + $0x54] sm:$0xf] %v234
        %269 = vst [vmem:[#allocation2 + $0x78] sm:$0xf] %v235
        %270 = vst [vmem:[#allocation2 + $0x9c] sm:$0xf] %v236
        %271 = vst [vmem:[#allocation2 + $0xc0] sm:$0xf] %v237
        %272 = vst [vmem:[#allocation2 + $0xe4] sm:$0xf] %v238
        %273 = vst [vmem:[#allocation2 + $0x108] sm:$0xf] %v239
        %274 = vst [vmem:[#allocation2 + $0x12c] sm:$0xf] %v240
        %275 = vst [vmem:[#allocation2 + $0x150] sm:$0xf] %v241
        %276 = vst [vmem:[#allocation2 + $0x174] sm:$0xf] %v242
        %277 = vst [vmem:[#allocation2 + $0x198] sm:$0xf] %v243
        %278 = vst [vmem:[#allocation2 + $0x1bc] sm:$0xf] %v244
        %279 = vst [vmem:[#allocation2 + $0x1e0] sm:$0xf] %v245
        %280 = vst [vmem:[#allocation2 + $0x204] sm:$0xf] %v246
        %281 = vst [vmem:[#allocation2 + $0x228] sm:$0xf] %v247
        %282 = vst [vmem:[#allocation2 + $0x18] sm:$0xf] %v234
        %283 = vst [vmem:[#allocation2 + $0x3c] sm:$0xf] %v235
        %284 = vst [vmem:[#allocation2 + $0x60] sm:$0xf] %v236
        %285 = vst [vmem:[#allocation2 + $0x84] sm:$0xf] %v237
        %286 = vst [vmem:[#allocation2 + $0xa8] sm:$0xf] %v238
        %287 = vst [vmem:[#allocation2 + $0xcc] sm:$0xf] %v239
        %288 = vst [vmem:[#allocation2 + $0xf0] sm:$0xf] %v240
        %289 = vst [vmem:[#allocation2 + $0x114] sm:$0xf] %v241
        %290 = vst [vmem:[#allocation2 + $0x138] sm:$0xf] %v242
        %291 = vst [vmem:[#allocation2 + $0x15c] sm:$0xf] %v243
        %292 = vst [vmem:[#allocation2 + $0x180] sm:$0xf] %v244
        %293 = vst [vmem:[#allocation2 + $0x1a4] sm:$0xf] %v245
        %294 = vst [vmem:[#allocation2 + $0x1c8] sm:$0xf] %v246
        %295 = vst [vmem:[#allocation2 + $0x1ec] sm:$0xf] %v247
        %296 = vst [vmem:[#allocation2 + $0x210] sm:$0xf] %v248
        %297 = vst [vmem:[#allocation2 + $0x234] sm:$0xf] %v249
        %v298 = vld [vmem:[%s223] sm:$0xf]
        %v299 = vld [vmem:[%s223 + $0x4] sm:$0xf]
        %v300 = vld [vmem:[%s223 + $0x8] sm:$0x1]
        %v301 = vld [vmem:[%s223 + $0xc] sm:$0xf]
        %v302 = vld [vmem:[%s223 + $0x10] sm:$0xf]
        %v303 = vld [vmem:[%s223 + $0x14] sm:$0x1]
        %v304 = vld [vmem:[%s223 + $0x18] sm:$0xf]
        %v305 = vld [vmem:[%s223 + $0x1c] sm:$0xf]
        %v306 = vld [vmem:[%s223 + $0x20] sm:$0x1]
        %v307 = vld [vmem:[%s223 + $0x24] sm:$0xf]
        %v308 = vld [vmem:[%s223 + $0x28] sm:$0xf]
        %v309 = vld [vmem:[%s223 + $0x2c] sm:$0x1]
        %v310 = vld [vmem:[%s223 + $0x30] sm:$0xf]
        %v311 = vld [vmem:[%s223 + $0x34] sm:$0xf]
        %v312 = vld [vmem:[%s223 + $0x38] sm:$0x1]
        %v313 = vld [vmem:[%s223 + $0x3c] sm:$0xf]
        %v314 = vld [vmem:[%s223 + $0x40] sm:$0xf]
        %v315 = vld [vmem:[%s223 + $0x44] sm:$0x1]
        %v316 = vld [vmem:[%s223 + $0x48] sm:$0xf]
        %v317 = vld [vmem:[%s223 + $0x4c] sm:$0xf]
        %v318 = vld [vmem:[%s223 + $0x50] sm:$0x1]
        %v319 = vld [vmem:[%s223 + $0x54] sm:$0xf]
        %v320 = vld [vmem:[%s223 + $0x58] sm:$0xf]
        %v321 = vld [vmem:[%s223 + $0x5c] sm:$0x1]
        %v322 = vld [vmem:[%s223 + $0x60] sm:$0xf]
        %v323 = vld [vmem:[%s223 + $0x64] sm:$0xf]
        %v324 = vld [vmem:[%s223 + $0x68] sm:$0x1]
        %v325 = vld [vmem:[%s223 + $0x6c] sm:$0xf]
        %v326 = vld [vmem:[%s223 + $0x70] sm:$0xf]
        %v327 = vld [vmem:[%s223 + $0x74] sm:$0x1]
        %vm328 = vsmask.f32 3328
        %vm329 = vsmask.f32 7440
        %vm330 = vmor %vm328, %vm329
        %v332 = vshrl.u32 %v298, 16
        %v334 = vrot.slane %v332, 4
        %v335 = vshll.u32 %v298, 16
        %v337 = vrot.slane %v335, 5
        %v338 = vor.u32 %v334, %v337
        %v339 = vrot.slane %v338, 4
        %v341 = vshll.u32 %v299, 16
        %v343 = vrot.slane %v341, 5
        %v344 = vsel %vm330, %v339, %v343
        %v345 = vshrl.u32 %v299, 16
        %v347 = vrot.slane %v345, 4
        %v348 = vor.u32 %v347, %v343
        %v349 = vrot.slane %v348, 4
        %v351 = vshll.u32 %v300, 16
        %v353 = vrot.slane %v351, 5
        %v354 = vsel %vm330, %v349, %v353
        %v356 = vshrl.u32 %v301, 16
        %v358 = vrot.slane %v356, 4
        %v359 = vshll.u32 %v301, 16
        %v361 = vrot.slane %v359, 5
        %v362 = vor.u32 %v358, %v361
        %v363 = vrot.slane %v362, 4
        %v365 = vshll.u32 %v302, 16
        %v367 = vrot.slane %v365, 5
        %v368 = vsel %vm330, %v363, %v367
        %v369 = vshrl.u32 %v302, 16
        %v371 = vrot.slane %v369, 4
        %v372 = vor.u32 %v371, %v367
        %v373 = vrot.slane %v372, 4
        %v375 = vshll.u32 %v303, 16
        %v377 = vrot.slane %v375, 5
        %v378 = vsel %vm330, %v373, %v377
        %v380 = vshrl.u32 %v304, 16
        %v382 = vrot.slane %v380, 4
        %v383 = vshll.u32 %v304, 16
        %v385 = vrot.slane %v383, 5
        %v386 = vor.u32 %v382, %v385
        %v387 = vrot.slane %v386, 4
        %v389 = vshll.u32 %v305, 16
        %v391 = vrot.slane %v389, 5
        %v392 = vsel %vm330, %v387, %v391
        %v393 = vshrl.u32 %v305, 16
        %v395 = vrot.slane %v393, 4
        %v396 = vor.u32 %v395, %v391
        %v397 = vrot.slane %v396, 4
        %v399 = vshll.u32 %v306, 16
        %v401 = vrot.slane %v399, 5
        %v402 = vsel %vm330, %v397, %v401
        %v404 = vshrl.u32 %v307, 16
        %v406 = vrot.slane %v404, 4
        %v407 = vshll.u32 %v307, 16
        %v409 = vrot.slane %v407, 5
        %v410 = vor.u32 %v406, %v409
        %v411 = vrot.slane %v410, 4
        %v413 = vshll.u32 %v308, 16
        %v415 = vrot.slane %v413, 5
        %v416 = vsel %vm330, %v411, %v415
        %v417 = vshrl.u32 %v308, 16
        %v419 = vrot.slane %v417, 4
        %v420 = vor.u32 %v419, %v415
        %v421 = vrot.slane %v420, 4
        %v423 = vshll.u32 %v309, 16
        %v425 = vrot.slane %v423, 5
        %v426 = vsel %vm330, %v421, %v425
        %v428 = vshrl.u32 %v310, 16
        %v430 = vrot.slane %v428, 4
        %v431 = vshll.u32 %v310, 16
        %v433 = vrot.slane %v431, 5
        %v434 = vor.u32 %v430, %v433
        %v435 = vrot.slane %v434, 4
        %v437 = vshll.u32 %v311, 16
        %v439 = vrot.slane %v437, 5
        %v440 = vsel %vm330, %v435, %v439
        %v441 = vshrl.u32 %v311, 16
        %v443 = vrot.slane %v441, 4
        %v444 = vor.u32 %v443, %v439
        %v445 = vrot.slane %v444, 4
        %v447 = vshll.u32 %v312, 16
        %v449 = vrot.slane %v447, 5
        %v450 = vsel %vm330, %v445, %v449
        %v452 = vshrl.u32 %v313, 16
        %v454 = vrot.slane %v452, 4
        %v455 = vshll.u32 %v313, 16
        %v457 = vrot.slane %v455, 5
        %v458 = vor.u32 %v454, %v457
        %v459 = vrot.slane %v458, 4
        %v461 = vshll.u32 %v314, 16
        %v463 = vrot.slane %v461, 5
        %v464 = vsel %vm330, %v459, %v463
        %v465 = vshrl.u32 %v314, 16
        %v467 = vrot.slane %v465, 4
        %v468 = vor.u32 %v467, %v463
        %v469 = vrot.slane %v468, 4
        %v471 = vshll.u32 %v315, 16
        %v473 = vrot.slane %v471, 5
        %v474 = vsel %vm330, %v469, %v473
        %v476 = vshrl.u32 %v316, 16
        %v478 = vrot.slane %v476, 4
        %v479 = vshll.u32 %v316, 16
        %v481 = vrot.slane %v479, 5
        %v482 = vor.u32 %v478, %v481
        %v483 = vrot.slane %v482, 4
        %v485 = vshll.u32 %v317, 16
        %v487 = vrot.slane %v485, 5
        %v488 = vsel %vm330, %v483, %v487
        %v489 = vshrl.u32 %v317, 16
        %v491 = vrot.slane %v489, 4
        %v492 = vor.u32 %v491, %v487
        %v493 = vrot.slane %v492, 4
        %v495 = vshll.u32 %v318, 16
        %v497 = vrot.slane %v495, 5
        %v498 = vsel %vm330, %v493, %v497
        %v500 = vshrl.u32 %v319, 16
        %v502 = vrot.slane %v500, 4
        %v503 = vshll.u32 %v319, 16
        %v505 = vrot.slane %v503, 5
        %v506 = vor.u32 %v502, %v505
        %v507 = vrot.slane %v506, 4
        %v509 = vshll.u32 %v320, 16
        %v511 = vrot.slane %v509, 5
        %v512 = vsel %vm330, %v507, %v511
        %v513 = vshrl.u32 %v320, 16
        %v515 = vrot.slane %v513, 4
        %v516 = vor.u32 %v515, %v511
        %v517 = vrot.slane %v516, 4
        %v519 = vshll.u32 %v321, 16
        %v521 = vrot.slane %v519, 5
        %v522 = vsel %vm330, %v517, %v521
        %539 = vst [vmem:[#allocation2 + $0x4] sm:$0xf] %v344
        %540 = vst [vmem:[#allocation2 + $0x28] sm:$0xf] %v354
        %541 = vst [vmem:[#allocation2 + $0x4c] sm:$0xf] %v368
        %542 = vst [vmem:[#allocation2 + $0x70] sm:$0xf] %v378
        %543 = vst [vmem:[#allocation2 + $0x94] sm:$0xf] %v392
        %544 = vst [vmem:[#allocation2 + $0xb8] sm:$0xf] %v402
        %545 = vst [vmem:[#allocation2 + $0xdc] sm:$0xf] %v416
        %546 = vst [vmem:[#allocation2 + $0x100] sm:$0xf] %v426
        %547 = vst [vmem:[#allocation2 + $0x124] sm:$0xf] %v440
        %548 = vst [vmem:[#allocation2 + $0x148] sm:$0xf] %v450
        %549 = vst [vmem:[#allocation2 + $0x16c] sm:$0xf] %v464
        %550 = vst [vmem:[#allocation2 + $0x190] sm:$0xf] %v474
        %551 = vst [vmem:[#allocation2 + $0x1b4] sm:$0xf] %v488
        %552 = vst [vmem:[#allocation2 + $0x1d8] sm:$0xf] %v498
        %553 = vst [vmem:[#allocation2 + $0x1fc] sm:$0xf] %v512
        %554 = vst [vmem:[#allocation2 + $0x220] sm:$0xf] %v522
        %v556 = vshrl.u32 %v322, 16
        %v558 = vrot.slane %v556, 4
        %v559 = vshll.u32 %v322, 16
        %v561 = vrot.slane %v559, 5
        %v562 = vor.u32 %v558, %v561
        %v563 = vrot.slane %v562, 4
        %v565 = vshll.u32 %v323, 16
        %v567 = vrot.slane %v565, 5
        %v568 = vsel %vm330, %v563, %v567
        %v569 = vshrl.u32 %v323, 16
        %v571 = vrot.slane %v569, 4
        %v572 = vor.u32 %v571, %v567
        %v573 = vrot.slane %v572, 4
        %v575 = vshll.u32 %v324, 16
        %v577 = vrot.slane %v575, 5
        %v578 = vsel %vm330, %v573, %v577
        %581 = vst [vmem:[#allocation2 + $0x10] sm:$0xf] %v368
        %582 = vst [vmem:[#allocation2 + $0x34] sm:$0xf] %v378
        %583 = vst [vmem:[#allocation2 + $0x58] sm:$0xf] %v392
        %584 = vst [vmem:[#allocation2 + $0x7c] sm:$0xf] %v402
        %585 = vst [vmem:[#allocation2 + $0xa0] sm:$0xf] %v416
        %586 = vst [vmem:[#allocation2 + $0xc4] sm:$0xf] %v426
        %587 = vst [vmem:[#allocation2 + $0xe8] sm:$0xf] %v440
        %588 = vst [vmem:[#allocation2 + $0x10c] sm:$0xf] %v450
        %589 = vst [vmem:[#allocation2 + $0x130] sm:$0xf] %v464
        %590 = vst [vmem:[#allocation2 + $0x154] sm:$0xf] %v474
        %591 = vst [vmem:[#allocation2 + $0x178] sm:$0xf] %v488
        %592 = vst [vmem:[#allocation2 + $0x19c] sm:$0xf] %v498
        %593 = vst [vmem:[#allocation2 + $0x1c0] sm:$0xf] %v512
        %594 = vst [vmem:[#allocation2 + $0x1e4] sm:$0xf] %v522
        %595 = vst [vmem:[#allocation2 + $0x208] sm:$0xf] %v568
        %596 = vst [vmem:[#allocation2 + $0x22c] sm:$0xf] %v578
        %v598 = vshrl.u32 %v325, 16
        %v600 = vrot.slane %v598, 4
        %v601 = vshll.u32 %v325, 16
        %v603 = vrot.slane %v601, 5
        %v604 = vor.u32 %v600, %v603
        %v605 = vrot.slane %v604, 4
        %v607 = vshll.u32 %v326, 16
        %v609 = vrot.slane %v607, 5
        %v610 = vsel %vm330, %v605, %v609
        %v611 = vshrl.u32 %v326, 16
        %v613 = vrot.slane %v611, 4
        %v614 = vor.u32 %v613, %v609
        %v615 = vrot.slane %v614, 4
        %v617 = vshll.u32 %v327, 16
        %v619 = vrot.slane %v617, 5
        %v620 = vsel %vm330, %v615, %v619
        %623 = vst [vmem:[#allocation2 + $0x1c] sm:$0xf] %v392
        %624 = vst [vmem:[#allocation2 + $0x40] sm:$0xf] %v402
        %625 = vst [vmem:[#allocation2 + $0x64] sm:$0xf] %v416
        %626 = vst [vmem:[#allocation2 + $0x88] sm:$0xf] %v426
        %627 = vst [vmem:[#allocation2 + $0xac] sm:$0xf] %v440
        %628 = vst [vmem:[#allocation2 + $0xd0] sm:$0xf] %v450
        %629 = vst [vmem:[#allocation2 + $0xf4] sm:$0xf] %v464
        %630 = vst [vmem:[#allocation2 + $0x118] sm:$0xf] %v474
        %631 = vst [vmem:[#allocation2 + $0x13c] sm:$0xf] %v488
        %632 = vst [vmem:[#allocation2 + $0x160] sm:$0xf] %v498
        %633 = vst [vmem:[#allocation2 + $0x184] sm:$0xf] %v512
        %634 = vst [vmem:[#allocation2 + $0x1a8] sm:$0xf] %v522
        %635 = vst [vmem:[#allocation2 + $0x1cc] sm:$0xf] %v568
        %636 = vst [vmem:[#allocation2 + $0x1f0] sm:$0xf] %v578
        %637 = vst [vmem:[#allocation2 + $0x214] sm:$0xf] %v610
        %638 = vst [vmem:[#allocation2 + $0x238] sm:$0xf] %v620
        %v639 = vld [vmem:[%s223] sm:$0xe]
        %v640 = vld [vmem:[%s223 + $0x4] sm:$0xf]
        %v641 = vld [vmem:[%s223 + $0x8] sm:$0x1]
        %v642 = vld [vmem:[%s223 + $0xc] sm:$0xe]
        %v643 = vld [vmem:[%s223 + $0x10] sm:$0xf]
        %v644 = vld [vmem:[%s223 + $0x14] sm:$0x1]
        %v645 = vld [vmem:[%s223 + $0x18] sm:$0xe]
        %v646 = vld [vmem:[%s223 + $0x1c] sm:$0xf]
        %v647 = vld [vmem:[%s223 + $0x20] sm:$0x1]
        %v648 = vld [vmem:[%s223 + $0x24] sm:$0xe]
        %v649 = vld [vmem:[%s223 + $0x28] sm:$0xf]
        %v650 = vld [vmem:[%s223 + $0x2c] sm:$0x1]
        %v651 = vld [vmem:[%s223 + $0x30] sm:$0xe]
        %v652 = vld [vmem:[%s223 + $0x34] sm:$0xf]
        %v653 = vld [vmem:[%s223 + $0x38] sm:$0x1]
        %v654 = vld [vmem:[%s223 + $0x3c] sm:$0xe]
        %v655 = vld [vmem:[%s223 + $0x40] sm:$0xf]
        %v656 = vld [vmem:[%s223 + $0x44] sm:$0x1]
        %v657 = vld [vmem:[%s223 + $0x48] sm:$0xe]
        %v658 = vld [vmem:[%s223 + $0x4c] sm:$0xf]
        %v659 = vld [vmem:[%s223 + $0x50] sm:$0x1]
        %v660 = vld [vmem:[%s223 + $0x54] sm:$0xe]
        %v661 = vld [vmem:[%s223 + $0x58] sm:$0xf]
        %v662 = vld [vmem:[%s223 + $0x5c] sm:$0x1]
        %v663 = vld [vmem:[%s223 + $0x60] sm:$0xe]
        %v664 = vld [vmem:[%s223 + $0x64] sm:$0xf]
        %v665 = vld [vmem:[%s223 + $0x68] sm:$0x1]
        %v666 = vld [vmem:[%s223 + $0x6c] sm:$0xe]
        %v667 = vld [vmem:[%s223 + $0x70] sm:$0xf]
        %v668 = vld [vmem:[%s223 + $0x74] sm:$0x1]
        %vm693 = vcmask 1042432
        %vm694 = vcmask 1046532
        %vm695 = vmor %vm693, %vm694
        %v696 = vrot.slane %v639, 5
        %v697 = vrot.slane %v696, 4
        %v698 = vrot.slane %v640, 5
        %v699 = vsel %vm695, %v697, %v698
        %v700 = vrot.slane %v698, 4
        %v701 = vrot.slane %v641, 5
        %v702 = vsel %vm695, %v700, %v701
        %v703 = vrot.slane %v642, 5
        %v704 = vrot.slane %v703, 4
        %v705 = vrot.slane %v643, 5
        %v706 = vsel %vm695, %v704, %v705
        %v707 = vrot.slane %v705, 4
        %v708 = vrot.slane %v644, 5
        %v709 = vsel %vm695, %v707, %v708
        %v710 = vrot.slane %v645, 5
        %v711 = vrot.slane %v710, 4
        %v712 = vrot.slane %v646, 5
        %v713 = vsel %vm695, %v711, %v712
        %v714 = vrot.slane %v712, 4
        %v715 = vrot.slane %v647, 5
        %v716 = vsel %vm695, %v714, %v715
        %v717 = vrot.slane %v648, 5
        %v718 = vrot.slane %v717, 4
        %v719 = vrot.slane %v649, 5
        %v720 = vsel %vm695, %v718, %v719
        %v721 = vrot.slane %v719, 4
        %v722 = vrot.slane %v650, 5
        %v723 = vsel %vm695, %v721, %v722
        %v724 = vrot.slane %v651, 5
        %v725 = vrot.slane %v724, 4
        %v726 = vrot.slane %v652, 5
        %v727 = vsel %vm695, %v725, %v726
        %v728 = vrot.slane %v726, 4
        %v729 = vrot.slane %v653, 5
        %v730 = vsel %vm695, %v728, %v729
        %v731 = vrot.slane %v654, 5
        %v732 = vrot.slane %v731, 4
        %v733 = vrot.slane %v655, 5
        %v734 = vsel %vm695, %v732, %v733
        %v735 = vrot.slane %v733, 4
        %v736 = vrot.slane %v656, 5
        %v737 = vsel %vm695, %v735, %v736
        %v738 = vrot.slane %v657, 5
        %v739 = vrot.slane %v738, 4
        %v740 = vrot.slane %v658, 5
        %v741 = vsel %vm695, %v739, %v740
        %v742 = vrot.slane %v740, 4
        %v743 = vrot.slane %v659, 5
        %v744 = vsel %vm695, %v742, %v743
        %v745 = vrot.slane %v660, 5
        %v746 = vrot.slane %v745, 4
        %v747 = vrot.slane %v661, 5
        %v748 = vsel %vm695, %v746, %v747
        %v749 = vrot.slane %v747, 4
        %v750 = vrot.slane %v662, 5
        %v751 = vsel %vm695, %v749, %v750
        %768 = vst [vmem:[#allocation2 + $0x8] sm:$0xf] %v699
        %769 = vst [vmem:[#allocation2 + $0x2c] sm:$0xf] %v702
        %770 = vst [vmem:[#allocation2 + $0x50] sm:$0xf] %v706
        %771 = vst [vmem:[#allocation2 + $0x74] sm:$0xf] %v709
        %772 = vst [vmem:[#allocation2 + $0x98] sm:$0xf] %v713
        %773 = vst [vmem:[#allocation2 + $0xbc] sm:$0xf] %v716
        %774 = vst [vmem:[#allocation2 + $0xe0] sm:$0xf] %v720
        %775 = vst [vmem:[#allocation2 + $0x104] sm:$0xf] %v723
        %776 = vst [vmem:[#allocation2 + $0x128] sm:$0xf] %v727
        %777 = vst [vmem:[#allocation2 + $0x14c] sm:$0xf] %v730
        %778 = vst [vmem:[#allocation2 + $0x170] sm:$0xf] %v734
        %779 = vst [vmem:[#allocation2 + $0x194] sm:$0xf] %v737
        %780 = vst [vmem:[#allocation2 + $0x1b8] sm:$0xf] %v741
        %781 = vst [vmem:[#allocation2 + $0x1dc] sm:$0xf] %v744
        %782 = vst [vmem:[#allocation2 + $0x200] sm:$0xf] %v748
        %783 = vst [vmem:[#allocation2 + $0x224] sm:$0xf] %v751
        %v787 = vrot.slane %v663, 5
        %v788 = vrot.slane %v787, 4
        %v789 = vrot.slane %v664, 5
        %v790 = vsel %vm695, %v788, %v789
        %v791 = vrot.slane %v789, 4
        %v792 = vrot.slane %v665, 5
        %v793 = vsel %vm695, %v791, %v792
        %796 = vst [vmem:[#allocation2 + $0x14] sm:$0xf] %v706
        %797 = vst [vmem:[#allocation2 + $0x38] sm:$0xf] %v709
        %798 = vst [vmem:[#allocation2 + $0x5c] sm:$0xf] %v713
        %799 = vst [vmem:[#allocation2 + $0x80] sm:$0xf] %v716
        %800 = vst [vmem:[#allocation2 + $0xa4] sm:$0xf] %v720
        %801 = vst [vmem:[#allocation2 + $0xc8] sm:$0xf] %v723
        %802 = vst [vmem:[#allocation2 + $0xec] sm:$0xf] %v727
        %803 = vst [vmem:[#allocation2 + $0x110] sm:$0xf] %v730
        %804 = vst [vmem:[#allocation2 + $0x134] sm:$0xf] %v734
        %805 = vst [vmem:[#allocation2 + $0x158] sm:$0xf] %v737
        %806 = vst [vmem:[#allocation2 + $0x17c] sm:$0xf] %v741
        %807 = vst [vmem:[#allocation2 + $0x1a0] sm:$0xf] %v744
        %808 = vst [vmem:[#allocation2 + $0x1c4] sm:$0xf] %v748
        %809 = vst [vmem:[#allocation2 + $0x1e8] sm:$0xf] %v751
        %810 = vst [vmem:[#allocation2 + $0x20c] sm:$0xf] %v790
        %811 = vst [vmem:[#allocation2 + $0x230] sm:$0xf] %v793
        %v815 = vrot.slane %v666, 5
        %v816 = vrot.slane %v815, 4
        %v817 = vrot.slane %v667, 5
        %v818 = vsel %vm695, %v816, %v817
        %v819 = vrot.slane %v817, 4
        %v820 = vrot.slane %v668, 5
        %v821 = vsel %vm695, %v819, %v820
        %824 = vst [vmem:[#allocation2 + $0x20] sm:$0xf] %v713
        %825 = vst [vmem:[#allocation2 + $0x44] sm:$0xf] %v716
        %826 = vst [vmem:[#allocation2 + $0x68] sm:$0xf] %v720
        %827 = vst [vmem:[#allocation2 + $0x8c] sm:$0xf] %v723
        %828 = vst [vmem:[#allocation2 + $0xb0] sm:$0xf] %v727
        %829 = vst [vmem:[#allocation2 + $0xd4] sm:$0xf] %v730
        %830 = vst [vmem:[#allocation2 + $0xf8] sm:$0xf] %v734
        %831 = vst [vmem:[#allocation2 + $0x11c] sm:$0xf] %v737
        %832 = vst [vmem:[#allocation2 + $0x140] sm:$0xf] %v741
        %833 = vst [vmem:[#allocation2 + $0x164] sm:$0xf] %v744
        %834 = vst [vmem:[#allocation2 + $0x188] sm:$0xf] %v748
        %835 = vst [vmem:[#allocation2 + $0x1ac] sm:$0xf] %v751
        %836 = vst [vmem:[#allocation2 + $0x1d0] sm:$0xf] %v790
        %837 = vst [vmem:[#allocation2 + $0x1f4] sm:$0xf] %v793
        %838 = vst [vmem:[#allocation2 + $0x218] sm:$0xf] %v818
        %839 = vst [vmem:[#allocation2 + $0x23c] sm:$0xf] %v821
        %v840 = vld [vmem:[#allocation2] sm:$0xff]
        %v841 = vld [vmem:[#allocation2 + $0x8] sm:$0xff]
        %v842 = vld [vmem:[#allocation2 + $0x10] sm:$0xff]
        %v843 = vld [vmem:[#allocation2 + $0x18] sm:$0xff]
        %v844 = vld [vmem:[#allocation2 + $0x20] sm:$0xf]
        %v845 = vld [vmem:[#allocation2 + $0x24] sm:$0xff]
        %v846 = vld [vmem:[#allocation2 + $0x2c] sm:$0xff]
        %v847 = vld [vmem:[#allocation2 + $0x34] sm:$0xff]
        %v848 = vld [vmem:[#allocation2 + $0x3c] sm:$0xff]
        %v849 = vld [vmem:[#allocation2 + $0x44] sm:$0xf]
        %v850 = vld [vmem:[#allocation2 + $0x48] sm:$0xff]
        %v851 = vld [vmem:[#allocation2 + $0x50] sm:$0xff]
        %v852 = vld [vmem:[#allocation2 + $0x58] sm:$0xff]
        %v853 = vld [vmem:[#allocation2 + $0x60] sm:$0xff]
        %v854 = vld [vmem:[#allocation2 + $0x68] sm:$0xf]
        %v855 = vld [vmem:[#allocation2 + $0x6c] sm:$0xff]
        %v856 = vld [vmem:[#allocation2 + $0x74] sm:$0xff]
        %v857 = vld [vmem:[#allocation2 + $0x7c] sm:$0xff]
        %v858 = vld [vmem:[#allocation2 + $0x84] sm:$0xff]
        %v859 = vld [vmem:[#allocation2 + $0x8c] sm:$0xf]
        %v860 = vld [vmem:[#allocation2 + $0x90] sm:$0xff]
        %v861 = vld [vmem:[#allocation2 + $0x98] sm:$0xff]
        %v862 = vld [vmem:[#allocation2 + $0xa0] sm:$0xff]
        %v863 = vld [vmem:[#allocation2 + $0xa8] sm:$0xff]
        %v864 = vld [vmem:[#allocation2 + $0xb0] sm:$0xf]
        %v865 = vld [vmem:[#allocation2 + $0xb4] sm:$0xff]
        %v866 = vld [vmem:[#allocation2 + $0xbc] sm:$0xff]
        %v867 = vld [vmem:[#allocation2 + $0xc4] sm:$0xff]
        %v868 = vld [vmem:[#allocation2 + $0xcc] sm:$0xff]
        %v869 = vld [vmem:[#allocation2 + $0xd4] sm:$0xf]
        %v870 = vld [vmem:[#allocation2 + $0xd8] sm:$0xff]
        %v871 = vld [vmem:[#allocation2 + $0xe0] sm:$0xff]
        %v872 = vld [vmem:[#allocation2 + $0xe8] sm:$0xff]
        %v873 = vld [vmem:[#allocation2 + $0xf0] sm:$0xff]
        %v874 = vld [vmem:[#allocation2 + $0xf8] sm:$0xf]
        %v875 = vld [vmem:[#allocation2 + $0xfc] sm:$0xff]
        %v876 = vld [vmem:[#allocation2 + $0x104] sm:$0xff]
        %v877 = vld [vmem:[#allocation2 + $0x10c] sm:$0xff]
        %v878 = vld [vmem:[#allocation2 + $0x114] sm:$0xff]
        %v879 = vld [vmem:[#allocation2 + $0x11c] sm:$0xf]
        %v880 = vld [vmem:[#allocation2 + $0x120] sm:$0xff]
        %v881 = vld [vmem:[#allocation2 + $0x128] sm:$0xff]
        %v882 = vld [vmem:[#allocation2 + $0x130] sm:$0xff]
        %v883 = vld [vmem:[#allocation2 + $0x138] sm:$0xff]
        %v884 = vld [vmem:[#allocation2 + $0x140] sm:$0xf]
        %v885 = vld [vmem:[#allocation2 + $0x144] sm:$0xff]
        %v886 = vld [vmem:[#allocation2 + $0x14c] sm:$0xff]
        %v887 = vld [vmem:[#allocation2 + $0x154] sm:$0xff]
        %v888 = vld [vmem:[#allocation2 + $0x15c] sm:$0xff]
        %v889 = vld [vmem:[#allocation2 + $0x164] sm:$0xf]
        %v890 = vld [vmem:[#allocation2 + $0x168] sm:$0xff]
        %v891 = vld [vmem:[#allocation2 + $0x170] sm:$0xff]
        %v892 = vld [vmem:[#allocation2 + $0x178] sm:$0xff]
        %v893 = vld [vmem:[#allocation2 + $0x180] sm:$0xff]
        %v894 = vld [vmem:[#allocation2 + $0x188] sm:$0xf]
        %v895 = vld [vmem:[#allocation2 + $0x18c] sm:$0xff]
        %v896 = vld [vmem:[#allocation2 + $0x194] sm:$0xff]
        %v897 = vld [vmem:[#allocation2 + $0x19c] sm:$0xff]
        %v898 = vld [vmem:[#allocation2 + $0x1a4] sm:$0xff]
        %v899 = vld [vmem:[#allocation2 + $0x1ac] sm:$0xf]
        %v900 = vld [vmem:[#allocation2 + $0x1b0] sm:$0xff]
        %v901 = vld [vmem:[#allocation2 + $0x1b8] sm:$0xff]
        %v902 = vld [vmem:[#allocation2 + $0x1c0] sm:$0xff]
        %v903 = vld [vmem:[#allocation2 + $0x1c8] sm:$0xff]
        %v904 = vld [vmem:[#allocation2 + $0x1d0] sm:$0xf]
        %v905 = vld [vmem:[#allocation2 + $0x1d4] sm:$0xff]
        %v906 = vld [vmem:[#allocation2 + $0x1dc] sm:$0xff]
        %v907 = vld [vmem:[#allocation2 + $0x1e4] sm:$0xff]
        %v908 = vld [vmem:[#allocation2 + $0x1ec] sm:$0xff]
        %v909 = vld [vmem:[#allocation2 + $0x1f4] sm:$0xf]
        %v910 = vld [vmem:[#allocation2 + $0x1f8] sm:$0xff]
        %v911 = vld [vmem:[#allocation2 + $0x200] sm:$0xff]
        %v912 = vld [vmem:[#allocation2 + $0x208] sm:$0xff]
        %v913 = vld [vmem:[#allocation2 + $0x210] sm:$0xff]
        %v914 = vld [vmem:[#allocation2 + $0x218] sm:$0xf]
        %v915 = vld [vmem:[#allocation2 + $0x21c] sm:$0xff]
        %v916 = vld [vmem:[#allocation2 + $0x224] sm:$0xff]
        %v917 = vld [vmem:[#allocation2 + $0x22c] sm:$0xff]
        %v918 = vld [vmem:[#allocation2 + $0x234] sm:$0xff]
        %v919 = vld [vmem:[#allocation2 + $0x23c] sm:$0xf]
        %v920 = vld [vmem:[#allocation5] sm:$0xf]
        %v921 = vld [vmem:[#allocation5 + $0x4] sm:$0xf]
        %v922 = vld [vmem:[#allocation5 + $0x8] sm:$0xf]
        %v923 = vld [vmem:[#allocation5 + $0xc] sm:$0xf]
        %v924 = vld [vmem:[#allocation5 + $0x10] sm:$0xf]
        %v925 = vld [vmem:[#allocation5 + $0x14] sm:$0xf]
        %v926 = vld [vmem:[#allocation5 + $0x18] sm:$0xf]
        %v927 = vld [vmem:[#allocation5 + $0x1c] sm:$0xf]
        %v928 = vld [vmem:[#allocation5 + $0x20] sm:$0xf]
        %v929 = vld [vmem:[#allocation5 + $0x24] sm:$0xf]
        %v930 = vld [vmem:[#allocation5 + $0x28] sm:$0xf]
        %v931 = vld [vmem:[#allocation5 + $0x2c] sm:$0xf]
        %v932 = vld [vmem:[#allocation5 + $0x30] sm:$0xf]
        %v933 = vld [vmem:[#allocation5 + $0x34] sm:$0xf]
        %v934 = vld [vmem:[#allocation5 + $0x38] sm:$0xf]
        %v935 = vld [vmem:[#allocation5 + $0x3c] sm:$0xf]
        %v936 = vld [vmem:[#allocation5 + $0x40] sm:$0xf]
        %v937 = vld [vmem:[#allocation5 + $0x44] sm:$0xf]
        %v938 = vld [vmem:[#allocation5 + $0x48] sm:$0xf]
        %v939 = vld [vmem:[#allocation5 + $0x4c] sm:$0xf]
        %v940 = vld [vmem:[#allocation5 + $0x50] sm:$0xf]
        %v941 = vld [vmem:[#allocation5 + $0x54] sm:$0xf]
        %v942 = vld [vmem:[#allocation5 + $0x58] sm:$0xf]
        %v943 = vld [vmem:[#allocation5 + $0x5c] sm:$0xf]
        %v944 = vld [vmem:[#allocation5 + $0x60] sm:$0xf]
        %v945 = vld [vmem:[#allocation5 + $0x64] sm:$0xf]
        %v946 = vld [vmem:[#allocation5 + $0x68] sm:$0xf]
        %v947 = vld [vmem:[#allocation5 + $0x6c] sm:$0xf]
        %v948 = vld [vmem:[#allocation5 + $0x70] sm:$0xf]
        %v949 = vld [vmem:[#allocation5 + $0x74] sm:$0xf]
        %v950 = vld [vmem:[#allocation5 + $0x78] sm:$0xf]
        %v951 = vld [vmem:[#allocation5 + $0x7c] sm:$0xf]
        %v952 = vld [vmem:[#allocation5 + $0x80] sm:$0xf]
        %v953 = vld [vmem:[#allocation5 + $0x84] sm:$0xf]
        %v954 = vld [vmem:[#allocation5 + $0x88] sm:$0xf]
        %v955 = vld [vmem:[#allocation5 + $0x8c] sm:$0xf]
        %v956 = vld [vmem:[#allocation5 + $0x90] sm:$0xf]
        %v957 = vld [vmem:[#allocation5 + $0x94] sm:$0xf]
        %v958 = vld [vmem:[#allocation5 + $0x98] sm:$0xf]
        %v959 = vld [vmem:[#allocation5 + $0x9c] sm:$0xf]
        %v960 = vld [vmem:[#allocation5 + $0xa0] sm:$0xf]
        %v961 = vld [vmem:[#allocation5 + $0xa4] sm:$0xf]
        %v962 = vld [vmem:[#allocation5 + $0xa8] sm:$0xf]
        %v963 = vld [vmem:[#allocation5 + $0xac] sm:$0xf]
        %v964 = vld [vmem:[#allocation5 + $0xb0] sm:$0xf]
        %v965 = vld [vmem:[#allocation5 + $0xb4] sm:$0xf]
        %v966 = vld [vmem:[#allocation5 + $0xb8] sm:$0xf]
        %v967 = vld [vmem:[#allocation5 + $0xbc] sm:$0xf]
        %v968 = vld [vmem:[#allocation5 + $0xc0] sm:$0xf]
        %v969 = vld [vmem:[#allocation5 + $0xc4] sm:$0xf]
        %v970 = vld [vmem:[#allocation5 + $0xc8] sm:$0xf]
        %v971 = vld [vmem:[#allocation5 + $0xcc] sm:$0xf]
        %v972 = vld [vmem:[#allocation5 + $0xd0] sm:$0xf]
        %v973 = vld [vmem:[#allocation5 + $0xd4] sm:$0xf]
        %v974 = vld [vmem:[#allocation5 + $0xd8] sm:$0xf]
        %v975 = vld [vmem:[#allocation5 + $0xdc] sm:$0xf]
        %v976 = vld [vmem:[#allocation5 + $0xe0] sm:$0xf]
        %v977 = vld [vmem:[#allocation5 + $0xe4] sm:$0xf]
        %v978 = vld [vmem:[#allocation5 + $0xe8] sm:$0xf]
        %v979 = vld [vmem:[#allocation5 + $0xec] sm:$0xf]
        %v980 = vld [vmem:[#allocation5 + $0xf0] sm:$0xf]
        %v981 = vld [vmem:[#allocation5 + $0xf4] sm:$0xf]
        %v982 = vld [vmem:[#allocation5 + $0xf8] sm:$0xf]
        %v983 = vld [vmem:[#allocation5 + $0xfc] sm:$0xf]
        %v984 = vld [vmem:[#allocation5 + $0x100] sm:$0xf]
        %v985 = vld [vmem:[#allocation5 + $0x104] sm:$0xf]
        %v986 = vld [vmem:[#allocation5 + $0x108] sm:$0xf]
        %v987 = vld [vmem:[#allocation5 + $0x10c] sm:$0xf]
        %v988 = vld [vmem:[#allocation5 + $0x110] sm:$0xf]
        %v989 = vld [vmem:[#allocation5 + $0x114] sm:$0xf]
        %v990 = vld [vmem:[#allocation5 + $0x118] sm:$0xf]
        %v991 = vld [vmem:[#allocation5 + $0x11c] sm:$0xf]
        %v992 = vld [vmem:[#allocation5 + $0x120] sm:$0xf]
        %v993 = vld [vmem:[#allocation5 + $0x124] sm:$0xf]
        %v994 = vld [vmem:[#allocation5 + $0x128] sm:$0xf]
        %v995 = vld [vmem:[#allocation5 + $0x12c] sm:$0xf]
        %v996 = vld [vmem:[#allocation5 + $0x130] sm:$0xf]
        %v997 = vld [vmem:[#allocation5 + $0x134] sm:$0xf]
        %v998 = vld [vmem:[#allocation5 + $0x138] sm:$0xf]
        %v999 = vld [vmem:[#allocation5 + $0x13c] sm:$0xf]
        %v1000 = vld [vmem:[#allocation5 + $0x140] sm:$0xf]
        %v1001 = vld [vmem:[#allocation5 + $0x144] sm:$0xf]
        %v1002 = vld [vmem:[#allocation5 + $0x148] sm:$0xf]
        %v1003 = vld [vmem:[#allocation5 + $0x14c] sm:$0xf]
        %v1004 = vld [vmem:[#allocation5 + $0x150] sm:$0xf]
        %v1005 = vld [vmem:[#allocation5 + $0x154] sm:$0xf]
        %v1006 = vld [vmem:[#allocation5 + $0x158] sm:$0xf]
        %v1007 = vld [vmem:[#allocation5 + $0x15c] sm:$0xf]
        %v1008 = vld [vmem:[#allocation5 + $0x160] sm:$0xf]
        %v1009 = vld [vmem:[#allocation5 + $0x164] sm:$0xf]
        %v1010 = vld [vmem:[#allocation5 + $0x168] sm:$0xf]
        %v1011 = vld [vmem:[#allocation5 + $0x16c] sm:$0xf]
        %v1012 = vld [vmem:[#allocation5 + $0x170] sm:$0xf]
        %v1013 = vld [vmem:[#allocation5 + $0x174] sm:$0xf]
        %v1014 = vld [vmem:[#allocation5 + $0x178] sm:$0xf]
        %v1015 = vld [vmem:[#allocation5 + $0x17c] sm:$0xf]
        %v1016 = vld [vmem:[#allocation5 + $0x180] sm:$0xf]
        %v1017 = vld [vmem:[#allocation5 + $0x184] sm:$0xf]
        %v1018 = vld [vmem:[#allocation5 + $0x188] sm:$0xf]
        %v1019 = vld [vmem:[#allocation5 + $0x18c] sm:$0xf]
        %v1020 = vld [vmem:[#allocation5 + $0x190] sm:$0xf]
        %v1021 = vld [vmem:[#allocation5 + $0x194] sm:$0xf]
        %v1022 = vld [vmem:[#allocation5 + $0x198] sm:$0xf]
        %v1023 = vld [vmem:[#allocation5 + $0x19c] sm:$0xf]
        %v1024 = vld [vmem:[#allocation5 + $0x1a0] sm:$0xf]
        %v1025 = vld [vmem:[#allocation5 + $0x1a4] sm:$0xf]
        %v1026 = vld [vmem:[#allocation5 + $0x1a8] sm:$0xf]
        %v1027 = vld [vmem:[#allocation5 + $0x1ac] sm:$0xf]
        %v1028 = vld [vmem:[#allocation5 + $0x1b0] sm:$0xf]
        %v1029 = vld [vmem:[#allocation5 + $0x1b4] sm:$0xf]
        %v1030 = vld [vmem:[#allocation5 + $0x1b8] sm:$0xf]
        %v1031 = vld [vmem:[#allocation5 + $0x1bc] sm:$0xf]
        %v1032 = vld [vmem:[#allocation5 + $0x1c0] sm:$0xf]
        %v1033 = vld [vmem:[#allocation5 + $0x1c4] sm:$0xf]
        %v1034 = vld [vmem:[#allocation5 + $0x1c8] sm:$0xf]
        %v1035 = vld [vmem:[#allocation5 + $0x1cc] sm:$0xf]
        %v1036 = vld [vmem:[#allocation5 + $0x1d0] sm:$0xf]
        %v1037 = vld [vmem:[#allocation5 + $0x1d4] sm:$0xf]
        %v1038 = vld [vmem:[#allocation5 + $0x1d8] sm:$0xf]
        %v1039 = vld [vmem:[#allocation5 + $0x1dc] sm:$0xf]
        %v1040 = vld [vmem:[#allocation5 + $0x1e0] sm:$0xf]
        %v1041 = vld [vmem:[#allocation5 + $0x1e4] sm:$0xf]
        %v1042 = vld [vmem:[#allocation5 + $0x1e8] sm:$0xf]
        %v1043 = vld [vmem:[#allocation5 + $0x1ec] sm:$0xf]
        %v1044 = vld [vmem:[#allocation5 + $0x1f0] sm:$0xf]
        %v1045 = vld [vmem:[#allocation5 + $0x1f4] sm:$0xf]
        %v1046 = vld [vmem:[#allocation5 + $0x1f8] sm:$0xf]
        %v1047 = vld [vmem:[#allocation5 + $0x1fc] sm:$0xf]
        %v1048 = vld [vmem:[#allocation5 + $0x200] sm:$0xf]
        %v1049 = vld [vmem:[#allocation5 + $0x204] sm:$0xf]
        %v1050 = vld [vmem:[#allocation5 + $0x208] sm:$0xf]
        %v1051 = vld [vmem:[#allocation5 + $0x20c] sm:$0xf]
        %v1052 = vld [vmem:[#allocation5 + $0x210] sm:$0xf]
        %v1053 = vld [vmem:[#allocation5 + $0x214] sm:$0xf]
        %v1054 = vld [vmem:[#allocation5 + $0x218] sm:$0xf]
        %v1055 = vld [vmem:[#allocation5 + $0x21c] sm:$0xf]
        %v1056 = vld [vmem:[#allocation5 + $0x220] sm:$0xf]
        %v1057 = vld [vmem:[#allocation5 + $0x224] sm:$0xf]
        %v1058 = vld [vmem:[#allocation5 + $0x228] sm:$0xf]
        %v1059 = vld [vmem:[#allocation5 + $0x22c] sm:$0xf]
        %v1060 = vld [vmem:[#allocation5 + $0x230] sm:$0xf]
        %v1061 = vld [vmem:[#allocation5 + $0x234] sm:$0xf]
        %v1062 = vld [vmem:[#allocation5 + $0x238] sm:$0xf]
        %v1063 = vld [vmem:[#allocation5 + $0x23c] sm:$0xf]
        %v1064 = vld [vmem:[%s2] sm:$0x1]
        %v1066 = vperm.slane %v1064, 0
        %v1148 = vunpack.c.l.b16 %v840
        %v1149 = vunpack.c.h.b16 %v840
        %v1150 = vunpack.c.l.b16 %v841
        %v1151 = vunpack.c.h.b16 %v841
        %v1152 = vunpack.c.l.b16 %v842
        %v1153 = vunpack.c.h.b16 %v842
        %v1154 = vunpack.c.l.b16 %v843
        %v1155 = vunpack.c.h.b16 %v843
        %v1156 = vunpack.c.l.b16 %v844
        %v1157 = vunpack.c.l.b16 %v845
        %v1158 = vunpack.c.h.b16 %v845
        %v1159 = vunpack.c.l.b16 %v846
        %v1160 = vunpack.c.h.b16 %v846
        %v1161 = vunpack.c.l.b16 %v847
        %v1162 = vunpack.c.h.b16 %v847
        %v1163 = vunpack.c.l.b16 %v848
        %v1164 = vunpack.c.h.b16 %v848
        %v1165 = vunpack.c.l.b16 %v849
        %v1166 = vunpack.c.l.b16 %v850
        %v1167 = vunpack.c.h.b16 %v850
        %v1168 = vunpack.c.l.b16 %v851
        %v1169 = vunpack.c.h.b16 %v851
        %v1170 = vunpack.c.l.b16 %v852
        %v1171 = vunpack.c.h.b16 %v852
        %v1172 = vunpack.c.l.b16 %v853
        %v1173 = vunpack.c.h.b16 %v853
        %v1174 = vunpack.c.l.b16 %v854
        %v1175 = vunpack.c.l.b16 %v855
        %v1176 = vunpack.c.h.b16 %v855
        %v1177 = vunpack.c.l.b16 %v856
        %v1178 = vunpack.c.h.b16 %v856
        %v1179 = vunpack.c.l.b16 %v857
        %v1180 = vunpack.c.h.b16 %v857
        %v1181 = vunpack.c.l.b16 %v858
        %v1182 = vunpack.c.h.b16 %v858
        %v1183 = vunpack.c.l.b16 %v859
        %v1184 = vunpack.c.l.b16 %v860
        %v1185 = vunpack.c.h.b16 %v860
        %v1186 = vunpack.c.l.b16 %v861
        %v1187 = vunpack.c.h.b16 %v861
        %v1188 = vunpack.c.l.b16 %v862
        %v1189 = vunpack.c.h.b16 %v862
        %v1190 = vunpack.c.l.b16 %v863
        %v1191 = vunpack.c.h.b16 %v863
        %v1192 = vunpack.c.l.b16 %v864
        %v1193 = vunpack.c.l.b16 %v865
        %v1194 = vunpack.c.h.b16 %v865
        %v1195 = vunpack.c.l.b16 %v866
        %v1196 = vunpack.c.h.b16 %v866
        %v1197 = vunpack.c.l.b16 %v867
        %v1198 = vunpack.c.h.b16 %v867
        %v1199 = vunpack.c.l.b16 %v868
        %v1200 = vunpack.c.h.b16 %v868
        %v1201 = vunpack.c.l.b16 %v869
        %v1202 = vunpack.c.l.b16 %v870
        %v1203 = vunpack.c.h.b16 %v870
        %v1204 = vunpack.c.l.b16 %v871
        %v1205 = vunpack.c.h.b16 %v871
        %v1206 = vunpack.c.l.b16 %v872
        %v1207 = vunpack.c.h.b16 %v872
        %v1208 = vunpack.c.l.b16 %v873
        %v1209 = vunpack.c.h.b16 %v873
        %v1210 = vunpack.c.l.b16 %v874
        %v1211 = vunpack.c.l.b16 %v875
        %v1212 = vunpack.c.h.b16 %v875
        %v1213 = vunpack.c.l.b16 %v876
        %v1214 = vunpack.c.h.b16 %v876
        %v1215 = vunpack.c.l.b16 %v877
        %v1216 = vunpack.c.h.b16 %v877
        %v1217 = vunpack.c.l.b16 %v878
        %v1218 = vunpack.c.h.b16 %v878
        %v1219 = vunpack.c.l.b16 %v879
        %v1220 = vunpack.c.l.b16 %v880
        %v1221 = vunpack.c.h.b16 %v880
        %v1222 = vunpack.c.l.b16 %v881
        %v1223 = vunpack.c.h.b16 %v881
        %v1224 = vunpack.c.l.b16 %v882
        %v1225 = vunpack.c.h.b16 %v882
        %v1226 = vunpack.c.l.b16 %v883
        %v1227 = vunpack.c.h.b16 %v883
        %v1228 = vunpack.c.l.b16 %v884
        %v1229 = vunpack.c.l.b16 %v885
        %v1230 = vunpack.c.h.b16 %v885
        %v1231 = vunpack.c.l.b16 %v886
        %v1232 = vunpack.c.h.b16 %v886
        %v1233 = vunpack.c.l.b16 %v887
        %v1234 = vunpack.c.h.b16 %v887
        %v1235 = vunpack.c.l.b16 %v888
        %v1236 = vunpack.c.h.b16 %v888
        %v1237 = vunpack.c.l.b16 %v889
        %v1238 = vunpack.c.l.b16 %v890
        %v1239 = vunpack.c.h.b16 %v890
        %v1240 = vunpack.c.l.b16 %v891
        %v1241 = vunpack.c.h.b16 %v891
        %v1242 = vunpack.c.l.b16 %v892
        %v1243 = vunpack.c.h.b16 %v892
        %v1244 = vunpack.c.l.b16 %v893
        %v1245 = vunpack.c.h.b16 %v893
        %v1246 = vunpack.c.l.b16 %v894
        %v1247 = vunpack.c.l.b16 %v895
        %v1248 = vunpack.c.h.b16 %v895
        %v1249 = vunpack.c.l.b16 %v896
        %v1250 = vunpack.c.h.b16 %v896
        %v1251 = vunpack.c.l.b16 %v897
        %v1252 = vunpack.c.h.b16 %v897
        %v1253 = vunpack.c.l.b16 %v898
        %v1254 = vunpack.c.h.b16 %v898
        %v1255 = vunpack.c.l.b16 %v899
        %v1256 = vunpack.c.l.b16 %v900
        %v1257 = vunpack.c.h.b16 %v900
        %v1258 = vunpack.c.l.b16 %v901
        %v1259 = vunpack.c.h.b16 %v901
        %v1260 = vunpack.c.l.b16 %v902
        %v1261 = vunpack.c.h.b16 %v902
        %v1262 = vunpack.c.l.b16 %v903
        %v1263 = vunpack.c.h.b16 %v903
        %v1264 = vunpack.c.l.b16 %v904
        %v1265 = vunpack.c.l.b16 %v905
        %v1266 = vunpack.c.h.b16 %v905
        %v1267 = vunpack.c.l.b16 %v906
        %v1268 = vunpack.c.h.b16 %v906
        %v1269 = vunpack.c.l.b16 %v907
        %v1270 = vunpack.c.h.b16 %v907
        %v1271 = vunpack.c.l.b16 %v908
        %v1272 = vunpack.c.h.b16 %v908
        %v1273 = vunpack.c.l.b16 %v909
        %v1274 = vunpack.c.l.b16 %v910
        %v1275 = vunpack.c.h.b16 %v910
        %v1276 = vunpack.c.l.b16 %v911
        %v1277 = vunpack.c.h.b16 %v911
        %v1278 = vunpack.c.l.b16 %v912
        %v1279 = vunpack.c.h.b16 %v912
        %v1280 = vunpack.c.l.b16 %v913
        %v1281 = vunpack.c.h.b16 %v913
        %v1282 = vunpack.c.l.b16 %v914
        %v1283 = vunpack.c.l.b16 %v915
        %v1284 = vunpack.c.h.b16 %v915
        %v1285 = vunpack.c.l.b16 %v916
        %v1286 = vunpack.c.h.b16 %v916
        %v1287 = vunpack.c.l.b16 %v917
        %v1288 = vunpack.c.h.b16 %v917
        %v1289 = vunpack.c.l.b16 %v918
        %v1290 = vunpack.c.h.b16 %v918
        %v1291 = vunpack.c.l.b16 %v919
        %v1292 = vpack.c.b16 %v1157, %v1148
        %v1293 = vpack.c.b16 %v1158, %v1149
        %v1294 = vpack.c.b16 %v1159, %v1150
        %v1295 = vpack.c.b16 %v1160, %v1151
        %v1296 = vpack.c.b16 %v1161, %v1152
        %v1297 = vpack.c.b16 %v1162, %v1153
        %v1298 = vpack.c.b16 %v1163, %v1154
        %v1299 = vpack.c.b16 %v1164, %v1155
        %v1300 = vpack.c.b16 %v1165, %v1156
        %v1301 = vpack.c.b16 %v1175, %v1166
        %v1302 = vpack.c.b16 %v1176, %v1167
        %v1303 = vpack.c.b16 %v1177, %v1168
        %v1304 = vpack.c.b16 %v1178, %v1169
        %v1305 = vpack.c.b16 %v1179, %v1170
        %v1306 = vpack.c.b16 %v1180, %v1171
        %v1307 = vpack.c.b16 %v1181, %v1172
        %v1308 = vpack.c.b16 %v1182, %v1173
        %v1309 = vpack.c.b16 %v1183, %v1174
        %v1310 = vpack.c.b16 %v1193, %v1184
        %v1311 = vpack.c.b16 %v1194, %v1185
        %v1312 = vpack.c.b16 %v1195, %v1186
        %v1313 = vpack.c.b16 %v1196, %v1187
        %v1314 = vpack.c.b16 %v1197, %v1188
        %v1315 = vpack.c.b16 %v1198, %v1189
        %v1316 = vpack.c.b16 %v1199, %v1190
        %v1317 = vpack.c.b16 %v1200, %v1191
        %v1318 = vpack.c.b16 %v1201, %v1192
        %v1319 = vpack.c.b16 %v1211, %v1202
        %v1320 = vpack.c.b16 %v1212, %v1203
        %v1321 = vpack.c.b16 %v1213, %v1204
        %v1322 = vpack.c.b16 %v1214, %v1205
        %v1323 = vpack.c.b16 %v1215, %v1206
        %v1324 = vpack.c.b16 %v1216, %v1207
        %v1325 = vpack.c.b16 %v1217, %v1208
        %v1326 = vpack.c.b16 %v1218, %v1209
        %v1327 = vpack.c.b16 %v1219, %v1210
        %v1328 = vpack.c.b16 %v1229, %v1220
        %v1329 = vpack.c.b16 %v1230, %v1221
        %v1330 = vpack.c.b16 %v1231, %v1222
        %v1331 = vpack.c.b16 %v1232, %v1223
        %v1332 = vpack.c.b16 %v1233, %v1224
        %v1333 = vpack.c.b16 %v1234, %v1225
        %v1334 = vpack.c.b16 %v1235, %v1226
        %v1335 = vpack.c.b16 %v1236, %v1227
        %v1336 = vpack.c.b16 %v1237, %v1228
        %v1337 = vpack.c.b16 %v1247, %v1238
        %v1338 = vpack.c.b16 %v1248, %v1239
        %v1339 = vpack.c.b16 %v1249, %v1240
        %v1340 = vpack.c.b16 %v1250, %v1241
        %v1341 = vpack.c.b16 %v1251, %v1242
        %v1342 = vpack.c.b16 %v1252, %v1243
        %v1343 = vpack.c.b16 %v1253, %v1244
        %v1344 = vpack.c.b16 %v1254, %v1245
        %v1345 = vpack.c.b16 %v1255, %v1246
        %v1346 = vpack.c.b16 %v1265, %v1256
        %v1347 = vpack.c.b16 %v1266, %v1257
        %v1348 = vpack.c.b16 %v1267, %v1258
        %v1349 = vpack.c.b16 %v1268, %v1259
        %v1350 = vpack.c.b16 %v1269, %v1260
        %v1351 = vpack.c.b16 %v1270, %v1261
        %v1352 = vpack.c.b16 %v1271, %v1262
        %v1353 = vpack.c.b16 %v1272, %v1263
        %v1354 = vpack.c.b16 %v1273, %v1264
        %v1355 = vpack.c.b16 %v1283, %v1274
        %v1356 = vpack.c.b16 %v1284, %v1275
        %v1357 = vpack.c.b16 %v1285, %v1276
        %v1358 = vpack.c.b16 %v1286, %v1277
        %v1359 = vpack.c.b16 %v1287, %v1278
        %v1360 = vpack.c.b16 %v1288, %v1279
        %v1361 = vpack.c.b16 %v1289, %v1280
        %v1362 = vpack.c.b16 %v1290, %v1281
        %v1363 = vpack.c.b16 %v1291, %v1282
        %v1580 = vunpack.c.l.b16 %v920
        %v1581 = vunpack.c.l.b16 %v921
        %v1582 = vunpack.c.l.b16 %v922
        %v1583 = vunpack.c.l.b16 %v923
        %v1584 = vunpack.c.l.b16 %v924
        %v1585 = vunpack.c.l.b16 %v925
        %v1586 = vunpack.c.l.b16 %v926
        %v1587 = vunpack.c.l.b16 %v927
        %v1588 = vunpack.c.l.b16 %v928
        %v1589 = vunpack.c.l.b16 %v929
        %v1590 = vunpack.c.l.b16 %v930
        %v1591 = vunpack.c.l.b16 %v931
        %v1592 = vunpack.c.l.b16 %v932
        %v1593 = vunpack.c.l.b16 %v933
        %v1594 = vunpack.c.l.b16 %v934
        %v1595 = vunpack.c.l.b16 %v935
        %v1596 = vunpack.c.l.b16 %v936
        %v1597 = vunpack.c.l.b16 %v937
        %v1598 = vunpack.c.l.b16 %v938
        %v1599 = vunpack.c.l.b16 %v939
        %v1600 = vunpack.c.l.b16 %v940
        %v1601 = vunpack.c.l.b16 %v941
        %v1602 = vunpack.c.l.b16 %v942
        %v1603 = vunpack.c.l.b16 %v943
        %v1604 = vunpack.c.l.b16 %v944
        %v1605 = vunpack.c.l.b16 %v945
        %v1606 = vunpack.c.l.b16 %v946
        %v1607 = vunpack.c.l.b16 %v947
        %v1608 = vunpack.c.l.b16 %v948
        %v1609 = vunpack.c.l.b16 %v949
        %v1610 = vunpack.c.l.b16 %v950
        %v1611 = vunpack.c.l.b16 %v951
        %v1612 = vunpack.c.l.b16 %v952
        %v1613 = vunpack.c.l.b16 %v953
        %v1614 = vunpack.c.l.b16 %v954
        %v1615 = vunpack.c.l.b16 %v955
        %v1616 = vunpack.c.l.b16 %v956
        %v1617 = vunpack.c.l.b16 %v957
        %v1618 = vunpack.c.l.b16 %v958
        %v1619 = vunpack.c.l.b16 %v959
        %v1620 = vunpack.c.l.b16 %v960
        %v1621 = vunpack.c.l.b16 %v961
        %v1622 = vunpack.c.l.b16 %v962
        %v1623 = vunpack.c.l.b16 %v963
        %v1624 = vunpack.c.l.b16 %v964
        %v1625 = vunpack.c.l.b16 %v965
        %v1626 = vunpack.c.l.b16 %v966
        %v1627 = vunpack.c.l.b16 %v967
        %v1628 = vunpack.c.l.b16 %v968
        %v1629 = vunpack.c.l.b16 %v969
        %v1630 = vunpack.c.l.b16 %v970
        %v1631 = vunpack.c.l.b16 %v971
        %v1632 = vunpack.c.l.b16 %v972
        %v1633 = vunpack.c.l.b16 %v973
        %v1634 = vunpack.c.l.b16 %v974
        %v1635 = vunpack.c.l.b16 %v975
        %v1636 = vunpack.c.l.b16 %v976
        %v1637 = vunpack.c.l.b16 %v977
        %v1638 = vunpack.c.l.b16 %v978
        %v1639 = vunpack.c.l.b16 %v979
        %v1640 = vunpack.c.l.b16 %v980
        %v1641 = vunpack.c.l.b16 %v981
        %v1642 = vunpack.c.l.b16 %v982
        %v1643 = vunpack.c.l.b16 %v983
        %v1644 = vunpack.c.l.b16 %v984
        %v1645 = vunpack.c.l.b16 %v985
        %v1646 = vunpack.c.l.b16 %v986
        %v1647 = vunpack.c.l.b16 %v987
        %v1648 = vunpack.c.l.b16 %v988
        %v1649 = vunpack.c.l.b16 %v989
        %v1650 = vunpack.c.l.b16 %v990
        %v1651 = vunpack.c.l.b16 %v991
        %v1652 = vunpack.c.l.b16 %v992
        %v1653 = vunpack.c.l.b16 %v993
        %v1654 = vunpack.c.l.b16 %v994
        %v1655 = vunpack.c.l.b16 %v995
        %v1656 = vunpack.c.l.b16 %v996
        %v1657 = vunpack.c.l.b16 %v997
        %v1658 = vunpack.c.l.b16 %v998
        %v1659 = vunpack.c.l.b16 %v999
        %v1660 = vunpack.c.l.b16 %v1000
        %v1661 = vunpack.c.l.b16 %v1001
        %v1662 = vunpack.c.l.b16 %v1002
        %v1663 = vunpack.c.l.b16 %v1003
        %v1664 = vunpack.c.l.b16 %v1004
        %v1665 = vunpack.c.l.b16 %v1005
        %v1666 = vunpack.c.l.b16 %v1006
        %v1667 = vunpack.c.l.b16 %v1007
        %v1668 = vunpack.c.l.b16 %v1008
        %v1669 = vunpack.c.l.b16 %v1009
        %v1670 = vunpack.c.l.b16 %v1010
        %v1671 = vunpack.c.l.b16 %v1011
        %v1672 = vunpack.c.l.b16 %v1012
        %v1673 = vunpack.c.l.b16 %v1013
        %v1674 = vunpack.c.l.b16 %v1014
        %v1675 = vunpack.c.l.b16 %v1015
        %v1676 = vunpack.c.l.b16 %v1016
        %v1677 = vunpack.c.l.b16 %v1017
        %v1678 = vunpack.c.l.b16 %v1018
        %v1679 = vunpack.c.l.b16 %v1019
        %v1680 = vunpack.c.l.b16 %v1020
        %v1681 = vunpack.c.l.b16 %v1021
        %v1682 = vunpack.c.l.b16 %v1022
        %v1683 = vunpack.c.l.b16 %v1023
        %v1684 = vunpack.c.l.b16 %v1024
        %v1685 = vunpack.c.l.b16 %v1025
        %v1686 = vunpack.c.l.b16 %v1026
        %v1687 = vunpack.c.l.b16 %v1027
        %v1688 = vunpack.c.l.b16 %v1028
        %v1689 = vunpack.c.l.b16 %v1029
        %v1690 = vunpack.c.l.b16 %v1030
        %v1691 = vunpack.c.l.b16 %v1031
        %v1692 = vunpack.c.l.b16 %v1032
        %v1693 = vunpack.c.l.b16 %v1033
        %v1694 = vunpack.c.l.b16 %v1034
        %v1695 = vunpack.c.l.b16 %v1035
        %v1696 = vunpack.c.l.b16 %v1036
        %v1697 = vunpack.c.l.b16 %v1037
        %v1698 = vunpack.c.l.b16 %v1038
        %v1699 = vunpack.c.l.b16 %v1039
        %v1700 = vunpack.c.l.b16 %v1040
        %v1701 = vunpack.c.l.b16 %v1041
        %v1702 = vunpack.c.l.b16 %v1042
        %v1703 = vunpack.c.l.b16 %v1043
        %v1704 = vunpack.c.l.b16 %v1044
        %v1705 = vunpack.c.l.b16 %v1045
        %v1706 = vunpack.c.l.b16 %v1046
        %v1707 = vunpack.c.l.b16 %v1047
        %v1708 = vunpack.c.l.b16 %v1048
        %v1709 = vunpack.c.l.b16 %v1049
        %v1710 = vunpack.c.l.b16 %v1050
        %v1711 = vunpack.c.l.b16 %v1051
        %v1712 = vunpack.c.l.b16 %v1052
        %v1713 = vunpack.c.l.b16 %v1053
        %v1714 = vunpack.c.l.b16 %v1054
        %v1715 = vunpack.c.l.b16 %v1055
        %v1716 = vunpack.c.l.b16 %v1056
        %v1717 = vunpack.c.l.b16 %v1057
        %v1718 = vunpack.c.l.b16 %v1058
        %v1719 = vunpack.c.l.b16 %v1059
        %v1720 = vunpack.c.l.b16 %v1060
        %v1721 = vunpack.c.l.b16 %v1061
        %v1722 = vunpack.c.l.b16 %v1062
        %v1723 = vunpack.c.l.b16 %v1063
        %v1724 = vpack.c.b16 %v1581, %v1580
        %v1725 = vpack.c.b16 %v1583, %v1582
        %v1726 = vpack.c.b16 %v1585, %v1584
        %v1727 = vpack.c.b16 %v1587, %v1586
        %v1728 = vpack.c.b16 %v1589, %v1588
        %v1729 = vpack.c.b16 %v1591, %v1590
        %v1730 = vpack.c.b16 %v1593, %v1592
        %v1731 = vpack.c.b16 %v1595, %v1594
        %v1732 = vpack.c.b16 %v1597, %v1596
        %v1733 = vpack.c.b16 %v1599, %v1598
        %v1734 = vpack.c.b16 %v1601, %v1600
        %v1735 = vpack.c.b16 %v1603, %v1602
        %v1736 = vpack.c.b16 %v1605, %v1604
        %v1737 = vpack.c.b16 %v1607, %v1606
        %v1738 = vpack.c.b16 %v1609, %v1608
        %v1739 = vpack.c.b16 %v1611, %v1610
        %v1740 = vpack.c.b16 %v1613, %v1612
        %v1741 = vpack.c.b16 %v1615, %v1614
        %v1742 = vpack.c.b16 %v1617, %v1616
        %v1743 = vpack.c.b16 %v1619, %v1618
        %v1744 = vpack.c.b16 %v1621, %v1620
        %v1745 = vpack.c.b16 %v1623, %v1622
        %v1746 = vpack.c.b16 %v1625, %v1624
        %v1747 = vpack.c.b16 %v1627, %v1626
        %v1748 = vpack.c.b16 %v1629, %v1628
        %v1749 = vpack.c.b16 %v1631, %v1630
        %v1750 = vpack.c.b16 %v1633, %v1632
        %v1751 = vpack.c.b16 %v1635, %v1634
        %v1752 = vpack.c.b16 %v1637, %v1636
        %v1753 = vpack.c.b16 %v1639, %v1638
        %v1754 = vpack.c.b16 %v1641, %v1640
        %v1755 = vpack.c.b16 %v1643, %v1642
        %v1756 = vpack.c.b16 %v1645, %v1644
        %v1757 = vpack.c.b16 %v1647, %v1646
        %v1758 = vpack.c.b16 %v1649, %v1648
        %v1759 = vpack.c.b16 %v1651, %v1650
        %v1760 = vpack.c.b16 %v1653, %v1652
        %v1761 = vpack.c.b16 %v1655, %v1654
        %v1762 = vpack.c.b16 %v1657, %v1656
        %v1763 = vpack.c.b16 %v1659, %v1658
        %v1764 = vpack.c.b16 %v1661, %v1660
        %v1765 = vpack.c.b16 %v1663, %v1662
        %v1766 = vpack.c.b16 %v1665, %v1664
        %v1767 = vpack.c.b16 %v1667, %v1666
        %v1768 = vpack.c.b16 %v1669, %v1668
        %v1769 = vpack.c.b16 %v1671, %v1670
        %v1770 = vpack.c.b16 %v1673, %v1672
        %v1771 = vpack.c.b16 %v1675, %v1674
        %v1772 = vpack.c.b16 %v1677, %v1676
        %v1773 = vpack.c.b16 %v1679, %v1678
        %v1774 = vpack.c.b16 %v1681, %v1680
        %v1775 = vpack.c.b16 %v1683, %v1682
        %v1776 = vpack.c.b16 %v1685, %v1684
        %v1777 = vpack.c.b16 %v1687, %v1686
        %v1778 = vpack.c.b16 %v1689, %v1688
        %v1779 = vpack.c.b16 %v1691, %v1690
        %v1780 = vpack.c.b16 %v1693, %v1692
        %v1781 = vpack.c.b16 %v1695, %v1694
        %v1782 = vpack.c.b16 %v1697, %v1696
        %v1783 = vpack.c.b16 %v1699, %v1698
        %v1784 = vpack.c.b16 %v1701, %v1700
        %v1785 = vpack.c.b16 %v1703, %v1702
        %v1786 = vpack.c.b16 %v1705, %v1704
        %v1787 = vpack.c.b16 %v1707, %v1706
        %v1788 = vpack.c.b16 %v1709, %v1708
        %v1789 = vpack.c.b16 %v1711, %v1710
        %v1790 = vpack.c.b16 %v1713, %v1712
        %v1791 = vpack.c.b16 %v1715, %v1714
        %v1792 = vpack.c.b16 %v1717, %v1716
        %v1793 = vpack.c.b16 %v1719, %v1718
        %v1794 = vpack.c.b16 %v1721, %v1720
        %v1795 = vpack.c.b16 %v1723, %v1722
        %1868 = vmatpush.bf16.msra.mxu0 %v1731
        %1869 = vmatpush.bf16.msra.mxu0 %v1730
        %1870 = vmatpush.bf16.msra.mxu0 %v1729
        %1871 = vmatpush.bf16.msra.mxu0 %v1728
        %1872 = vmatpush.bf16.msra.mxu0 %v1727
        %1873 = vmatpush.bf16.msra.mxu0 %v1726
        %1874 = vmatpush.bf16.msra.mxu0 %v1725
        %1875 = vmatpush.bf16.msra.mxu0 %v1724
        %1876 = vmatmul.bf16.gmra.mxu0 %v1292
        %v1877 = vpop.f32.mrf.mxu0
        %v1878 = vadd.f32 %v1066, %v1877
        %v1879 = vpop.f32.mrf.mxu0
        %v1880 = vadd.f32 %v1066, %v1879
        %1881 = vmatmul.bf16.gmra.mxu0 %v1301
        %v1882 = vpop.f32.mrf.mxu0
        %v1883 = vadd.f32 %v1066, %v1882
        %v1884 = vpop.f32.mrf.mxu0
        %v1885 = vadd.f32 %v1066, %v1884
        %1886 = vmatmul.bf16.gmra.mxu0 %v1310
        %v1887 = vpop.f32.mrf.mxu0
        %v1888 = vadd.f32 %v1066, %v1887
        %v1889 = vpop.f32.mrf.mxu0
        %v1890 = vadd.f32 %v1066, %v1889
        %1891 = vmatmul.bf16.gmra.mxu0 %v1319
        %v1892 = vpop.f32.mrf.mxu0
        %v1893 = vadd.f32 %v1066, %v1892
        %v1894 = vpop.f32.mrf.mxu0
        %v1895 = vadd.f32 %v1066, %v1894
        %1896 = vmatmul.bf16.gmra.mxu0 %v1328
        %v1897 = vpop.f32.mrf.mxu0
        %v1898 = vadd.f32 %v1066, %v1897
        %v1899 = vpop.f32.mrf.mxu0
        %v1900 = vadd.f32 %v1066, %v1899
        %1901 = vmatmul.bf16.gmra.mxu0 %v1337
        %v1902 = vpop.f32.mrf.mxu0
        %v1903 = vadd.f32 %v1066, %v1902
        %v1904 = vpop.f32.mrf.mxu0
        %v1905 = vadd.f32 %v1066, %v1904
        %1906 = vmatmul.bf16.gmra.mxu0 %v1346
        %v1907 = vpop.f32.mrf.mxu0
        %v1908 = vadd.f32 %v1066, %v1907
        %v1909 = vpop.f32.mrf.mxu0
        %v1910 = vadd.f32 %v1066, %v1909
        %1911 = vmatmul.bf16.gmra.mxu0 %v1355
        %v1912 = vpop.f32.mrf.mxu0
        %v1913 = vadd.f32 %v1066, %v1912
        %v1914 = vpop.f32.mrf.mxu0
        %v1915 = vadd.f32 %v1066, %v1914
        %1916 = vdwg.mxu0
        %1917 = vmatpush.bf16.msra.mxu0 %v1739
        %1918 = vmatpush.bf16.msra.mxu0 %v1738
        %1919 = vmatpush.bf16.msra.mxu0 %v1737
        %1920 = vmatpush.bf16.msra.mxu0 %v1736
        %1921 = vmatpush.bf16.msra.mxu0 %v1735
        %1922 = vmatpush.bf16.msra.mxu0 %v1734
        %1923 = vmatpush.bf16.msra.mxu0 %v1733
        %1924 = vmatpush.bf16.msra.mxu0 %v1732
        %1925 = vmatmul.bf16.gmra.mxu0 %v1293
        %v1926 = vpop.f32.mrf.mxu0
        %v1927 = vadd.f32 %v1878, %v1926
        %v1928 = vpop.f32.mrf.mxu0
        %v1929 = vadd.f32 %v1880, %v1928
        %1930 = vmatmul.bf16.gmra.mxu0 %v1302
        %v1931 = vpop.f32.mrf.mxu0
        %v1932 = vadd.f32 %v1883, %v1931
        %v1933 = vpop.f32.mrf.mxu0
        %v1934 = vadd.f32 %v1885, %v1933
        %1935 = vmatmul.bf16.gmra.mxu0 %v1311
        %v1936 = vpop.f32.mrf.mxu0
        %v1937 = vadd.f32 %v1888, %v1936
        %v1938 = vpop.f32.mrf.mxu0
        %v1939 = vadd.f32 %v1890, %v1938
        %1940 = vmatmul.bf16.gmra.mxu0 %v1320
        %v1941 = vpop.f32.mrf.mxu0
        %v1942 = vadd.f32 %v1893, %v1941
        %v1943 = vpop.f32.mrf.mxu0
        %v1944 = vadd.f32 %v1895, %v1943
        %1945 = vmatmul.bf16.gmra.mxu0 %v1329
        %v1946 = vpop.f32.mrf.mxu0
        %v1947 = vadd.f32 %v1898, %v1946
        %v1948 = vpop.f32.mrf.mxu0
        %v1949 = vadd.f32 %v1900, %v1948
        %1950 = vmatmul.bf16.gmra.mxu0 %v1338
        %v1951 = vpop.f32.mrf.mxu0
        %v1952 = vadd.f32 %v1903, %v1951
        %v1953 = vpop.f32.mrf.mxu0
        %v1954 = vadd.f32 %v1905, %v1953
        %1955 = vmatmul.bf16.gmra.mxu0 %v1347
        %v1956 = vpop.f32.mrf.mxu0
        %v1957 = vadd.f32 %v1908, %v1956
        %v1958 = vpop.f32.mrf.mxu0
        %v1959 = vadd.f32 %v1910, %v1958
        %1960 = vmatmul.bf16.gmra.mxu0 %v1356
        %v1961 = vpop.f32.mrf.mxu0
        %v1962 = vadd.f32 %v1913, %v1961
        %v1963 = vpop.f32.mrf.mxu0
        %v1964 = vadd.f32 %v1915, %v1963
        %1965 = vdwg.mxu0
        %1966 = vmatpush.bf16.msra.mxu0 %v1747
        %1967 = vmatpush.bf16.msra.mxu0 %v1746
        %1968 = vmatpush.bf16.msra.mxu0 %v1745
        %1969 = vmatpush.bf16.msra.mxu0 %v1744
        %1970 = vmatpush.bf16.msra.mxu0 %v1743
        %1971 = vmatpush.bf16.msra.mxu0 %v1742
        %1972 = vmatpush.bf16.msra.mxu0 %v1741
        %1973 = vmatpush.bf16.msra.mxu0 %v1740
        %1974 = vmatmul.bf16.gmra.mxu0 %v1294
        %v1975 = vpop.f32.mrf.mxu0
        %v1976 = vadd.f32 %v1927, %v1975
        %v1977 = vpop.f32.mrf.mxu0
        %v1978 = vadd.f32 %v1929, %v1977
        %1979 = vmatmul.bf16.gmra.mxu0 %v1303
        %v1980 = vpop.f32.mrf.mxu0
        %v1981 = vadd.f32 %v1932, %v1980
        %v1982 = vpop.f32.mrf.mxu0
        %v1983 = vadd.f32 %v1934, %v1982
        %1984 = vmatmul.bf16.gmra.mxu0 %v1312
        %v1985 = vpop.f32.mrf.mxu0
        %v1986 = vadd.f32 %v1937, %v1985
        %v1987 = vpop.f32.mrf.mxu0
        %v1988 = vadd.f32 %v1939, %v1987
        %1989 = vmatmul.bf16.gmra.mxu0 %v1321
        %v1990 = vpop.f32.mrf.mxu0
        %v1991 = vadd.f32 %v1942, %v1990
        %v1992 = vpop.f32.mrf.mxu0
        %v1993 = vadd.f32 %v1944, %v1992
        %1994 = vmatmul.bf16.gmra.mxu0 %v1330
        %v1995 = vpop.f32.mrf.mxu0
        %v1996 = vadd.f32 %v1947, %v1995
        %v1997 = vpop.f32.mrf.mxu0
        %v1998 = vadd.f32 %v1949, %v1997
        %1999 = vmatmul.bf16.gmra.mxu0 %v1339
        %v2000 = vpop.f32.mrf.mxu0
        %v2001 = vadd.f32 %v1952, %v2000
        %v2002 = vpop.f32.mrf.mxu0
        %v2003 = vadd.f32 %v1954, %v2002
        %2004 = vmatmul.bf16.gmra.mxu0 %v1348
        %v2005 = vpop.f32.mrf.mxu0
        %v2006 = vadd.f32 %v1957, %v2005
        %v2007 = vpop.f32.mrf.mxu0
        %v2008 = vadd.f32 %v1959, %v2007
        %2009 = vmatmul.bf16.gmra.mxu0 %v1357
        %v2010 = vpop.f32.mrf.mxu0
        %v2011 = vadd.f32 %v1962, %v2010
        %v2012 = vpop.f32.mrf.mxu0
        %v2013 = vadd.f32 %v1964, %v2012
        %2014 = vdwg.mxu0
        %2015 = vmatpush.bf16.msra.mxu0 %v1755
        %2016 = vmatpush.bf16.msra.mxu0 %v1754
        %2017 = vmatpush.bf16.msra.mxu0 %v1753
        %2018 = vmatpush.bf16.msra.mxu0 %v1752
        %2019 = vmatpush.bf16.msra.mxu0 %v1751
        %2020 = vmatpush.bf16.msra.mxu0 %v1750
        %2021 = vmatpush.bf16.msra.mxu0 %v1749
        %2022 = vmatpush.bf16.msra.mxu0 %v1748
        %2023 = vmatmul.bf16.gmra.mxu0 %v1295
        %v2024 = vpop.f32.mrf.mxu0
        %v2025 = vadd.f32 %v1976, %v2024
        %v2026 = vpop.f32.mrf.mxu0
        %v2027 = vadd.f32 %v1978, %v2026
        %2028 = vmatmul.bf16.gmra.mxu0 %v1304
        %v2029 = vpop.f32.mrf.mxu0
        %v2030 = vadd.f32 %v1981, %v2029
        %v2031 = vpop.f32.mrf.mxu0
        %v2032 = vadd.f32 %v1983, %v2031
        %2033 = vmatmul.bf16.gmra.mxu0 %v1313
        %v2034 = vpop.f32.mrf.mxu0
        %v2035 = vadd.f32 %v1986, %v2034
        %v2036 = vpop.f32.mrf.mxu0
        %v2037 = vadd.f32 %v1988, %v2036
        %2038 = vmatmul.bf16.gmra.mxu0 %v1322
        %v2039 = vpop.f32.mrf.mxu0
        %v2040 = vadd.f32 %v1991, %v2039
        %v2041 = vpop.f32.mrf.mxu0
        %v2042 = vadd.f32 %v1993, %v2041
        %2043 = vmatmul.bf16.gmra.mxu0 %v1331
        %v2044 = vpop.f32.mrf.mxu0
        %v2045 = vadd.f32 %v1996, %v2044
        %v2046 = vpop.f32.mrf.mxu0
        %v2047 = vadd.f32 %v1998, %v2046
        %2048 = vmatmul.bf16.gmra.mxu0 %v1340
        %v2049 = vpop.f32.mrf.mxu0
        %v2050 = vadd.f32 %v2001, %v2049
        %v2051 = vpop.f32.mrf.mxu0
        %v2052 = vadd.f32 %v2003, %v2051
        %2053 = vmatmul.bf16.gmra.mxu0 %v1349
        %v2054 = vpop.f32.mrf.mxu0
        %v2055 = vadd.f32 %v2006, %v2054
        %v2056 = vpop.f32.mrf.mxu0
        %v2057 = vadd.f32 %v2008, %v2056
        %2058 = vmatmul.bf16.gmra.mxu0 %v1358
        %v2059 = vpop.f32.mrf.mxu0
        %v2060 = vadd.f32 %v2011, %v2059
        %v2061 = vpop.f32.mrf.mxu0
        %v2062 = vadd.f32 %v2013, %v2061
        %2063 = vdwg.mxu0
        %2064 = vmatpush.bf16.msra.mxu0 %v1763
        %2065 = vmatpush.bf16.msra.mxu0 %v1762
        %2066 = vmatpush.bf16.msra.mxu0 %v1761
        %2067 = vmatpush.bf16.msra.mxu0 %v1760
        %2068 = vmatpush.bf16.msra.mxu0 %v1759
        %2069 = vmatpush.bf16.msra.mxu0 %v1758
        %2070 = vmatpush.bf16.msra.mxu0 %v1757
        %2071 = vmatpush.bf16.msra.mxu0 %v1756
        %2072 = vmatmul.bf16.gmra.mxu0 %v1296
        %v2073 = vpop.f32.mrf.mxu0
        %v2074 = vadd.f32 %v2025, %v2073
        %v2075 = vpop.f32.mrf.mxu0
        %v2076 = vadd.f32 %v2027, %v2075
        %2077 = vmatmul.bf16.gmra.mxu0 %v1305
        %v2078 = vpop.f32.mrf.mxu0
        %v2079 = vadd.f32 %v2030, %v2078
        %v2080 = vpop.f32.mrf.mxu0
        %v2081 = vadd.f32 %v2032, %v2080
        %2082 = vmatmul.bf16.gmra.mxu0 %v1314
        %v2083 = vpop.f32.mrf.mxu0
        %v2084 = vadd.f32 %v2035, %v2083
        %v2085 = vpop.f32.mrf.mxu0
        %v2086 = vadd.f32 %v2037, %v2085
        %2087 = vmatmul.bf16.gmra.mxu0 %v1323
        %v2088 = vpop.f32.mrf.mxu0
        %v2089 = vadd.f32 %v2040, %v2088
        %v2090 = vpop.f32.mrf.mxu0
        %v2091 = vadd.f32 %v2042, %v2090
        %2092 = vmatmul.bf16.gmra.mxu0 %v1332
        %v2093 = vpop.f32.mrf.mxu0
        %v2094 = vadd.f32 %v2045, %v2093
        %v2095 = vpop.f32.mrf.mxu0
        %v2096 = vadd.f32 %v2047, %v2095
        %2097 = vmatmul.bf16.gmra.mxu0 %v1341
        %v2098 = vpop.f32.mrf.mxu0
        %v2099 = vadd.f32 %v2050, %v2098
        %v2100 = vpop.f32.mrf.mxu0
        %v2101 = vadd.f32 %v2052, %v2100
        %2102 = vmatmul.bf16.gmra.mxu0 %v1350
        %v2103 = vpop.f32.mrf.mxu0
        %v2104 = vadd.f32 %v2055, %v2103
        %v2105 = vpop.f32.mrf.mxu0
        %v2106 = vadd.f32 %v2057, %v2105
        %2107 = vmatmul.bf16.gmra.mxu0 %v1359
        %v2108 = vpop.f32.mrf.mxu0
        %v2109 = vadd.f32 %v2060, %v2108
        %v2110 = vpop.f32.mrf.mxu0
        %v2111 = vadd.f32 %v2062, %v2110
        %2112 = vdwg.mxu0
        %2113 = vmatpush.bf16.msra.mxu0 %v1771
        %2114 = vmatpush.bf16.msra.mxu0 %v1770
        %2115 = vmatpush.bf16.msra.mxu0 %v1769
        %2116 = vmatpush.bf16.msra.mxu0 %v1768
        %2117 = vmatpush.bf16.msra.mxu0 %v1767
        %2118 = vmatpush.bf16.msra.mxu0 %v1766
        %2119 = vmatpush.bf16.msra.mxu0 %v1765
        %2120 = vmatpush.bf16.msra.mxu0 %v1764
        %2121 = vmatmul.bf16.gmra.mxu0 %v1297
        %v2122 = vpop.f32.mrf.mxu0
        %v2123 = vadd.f32 %v2074, %v2122
        %v2124 = vpop.f32.mrf.mxu0
        %v2125 = vadd.f32 %v2076, %v2124
        %2126 = vmatmul.bf16.gmra.mxu0 %v1306
        %v2127 = vpop.f32.mrf.mxu0
        %v2128 = vadd.f32 %v2079, %v2127
        %v2129 = vpop.f32.mrf.mxu0
        %v2130 = vadd.f32 %v2081, %v2129
        %2131 = vmatmul.bf16.gmra.mxu0 %v1315
        %v2132 = vpop.f32.mrf.mxu0
        %v2133 = vadd.f32 %v2084, %v2132
        %v2134 = vpop.f32.mrf.mxu0
        %v2135 = vadd.f32 %v2086, %v2134
        %2136 = vmatmul.bf16.gmra.mxu0 %v1324
        %v2137 = vpop.f32.mrf.mxu0
        %v2138 = vadd.f32 %v2089, %v2137
        %v2139 = vpop.f32.mrf.mxu0
        %v2140 = vadd.f32 %v2091, %v2139
        %2141 = vmatmul.bf16.gmra.mxu0 %v1333
        %v2142 = vpop.f32.mrf.mxu0
        %v2143 = vadd.f32 %v2094, %v2142
        %v2144 = vpop.f32.mrf.mxu0
        %v2145 = vadd.f32 %v2096, %v2144
        %2146 = vmatmul.bf16.gmra.mxu0 %v1342
        %v2147 = vpop.f32.mrf.mxu0
        %v2148 = vadd.f32 %v2099, %v2147
        %v2149 = vpop.f32.mrf.mxu0
        %v2150 = vadd.f32 %v2101, %v2149
        %2151 = vmatmul.bf16.gmra.mxu0 %v1351
        %v2152 = vpop.f32.mrf.mxu0
        %v2153 = vadd.f32 %v2104, %v2152
        %v2154 = vpop.f32.mrf.mxu0
        %v2155 = vadd.f32 %v2106, %v2154
        %2156 = vmatmul.bf16.gmra.mxu0 %v1360
        %v2157 = vpop.f32.mrf.mxu0
        %v2158 = vadd.f32 %v2109, %v2157
        %v2159 = vpop.f32.mrf.mxu0
        %v2160 = vadd.f32 %v2111, %v2159
        %2161 = vdwg.mxu0
        %2162 = vmatpush.bf16.msra.mxu0 %v1779
        %2163 = vmatpush.bf16.msra.mxu0 %v1778
        %2164 = vmatpush.bf16.msra.mxu0 %v1777
        %2165 = vmatpush.bf16.msra.mxu0 %v1776
        %2166 = vmatpush.bf16.msra.mxu0 %v1775
        %2167 = vmatpush.bf16.msra.mxu0 %v1774
        %2168 = vmatpush.bf16.msra.mxu0 %v1773
        %2169 = vmatpush.bf16.msra.mxu0 %v1772
        %2170 = vmatmul.bf16.gmra.mxu0 %v1298
        %v2171 = vpop.f32.mrf.mxu0
        %v2172 = vadd.f32 %v2123, %v2171
        %v2173 = vpop.f32.mrf.mxu0
        %v2174 = vadd.f32 %v2125, %v2173
        %2175 = vmatmul.bf16.gmra.mxu0 %v1307
        %v2176 = vpop.f32.mrf.mxu0
        %v2177 = vadd.f32 %v2128, %v2176
        %v2178 = vpop.f32.mrf.mxu0
        %v2179 = vadd.f32 %v2130, %v2178
        %2180 = vmatmul.bf16.gmra.mxu0 %v1316
        %v2181 = vpop.f32.mrf.mxu0
        %v2182 = vadd.f32 %v2133, %v2181
        %v2183 = vpop.f32.mrf.mxu0
        %v2184 = vadd.f32 %v2135, %v2183
        %2185 = vmatmul.bf16.gmra.mxu0 %v1325
        %v2186 = vpop.f32.mrf.mxu0
        %v2187 = vadd.f32 %v2138, %v2186
        %v2188 = vpop.f32.mrf.mxu0
        %v2189 = vadd.f32 %v2140, %v2188
        %2190 = vmatmul.bf16.gmra.mxu0 %v1334
        %v2191 = vpop.f32.mrf.mxu0
        %v2192 = vadd.f32 %v2143, %v2191
        %v2193 = vpop.f32.mrf.mxu0
        %v2194 = vadd.f32 %v2145, %v2193
        %2195 = vmatmul.bf16.gmra.mxu0 %v1343
        %v2196 = vpop.f32.mrf.mxu0
        %v2197 = vadd.f32 %v2148, %v2196
        %v2198 = vpop.f32.mrf.mxu0
        %v2199 = vadd.f32 %v2150, %v2198
        %2200 = vmatmul.bf16.gmra.mxu0 %v1352
        %v2201 = vpop.f32.mrf.mxu0
        %v2202 = vadd.f32 %v2153, %v2201
        %v2203 = vpop.f32.mrf.mxu0
        %v2204 = vadd.f32 %v2155, %v2203
        %2205 = vmatmul.bf16.gmra.mxu0 %v1361
        %v2206 = vpop.f32.mrf.mxu0
        %v2207 = vadd.f32 %v2158, %v2206
        %v2208 = vpop.f32.mrf.mxu0
        %v2209 = vadd.f32 %v2160, %v2208
        %2210 = vdwg.mxu0
        %2211 = vmatpush.bf16.msra.mxu0 %v1787
        %2212 = vmatpush.bf16.msra.mxu0 %v1786
        %2213 = vmatpush.bf16.msra.mxu0 %v1785
        %2214 = vmatpush.bf16.msra.mxu0 %v1784
        %2215 = vmatpush.bf16.msra.mxu0 %v1783
        %2216 = vmatpush.bf16.msra.mxu0 %v1782
        %2217 = vmatpush.bf16.msra.mxu0 %v1781
        %2218 = vmatpush.bf16.msra.mxu0 %v1780
        %2219 = vmatmul.bf16.gmra.mxu0 %v1299
        %v2220 = vpop.f32.mrf.mxu0
        %v2221 = vadd.f32 %v2172, %v2220
        %v2222 = vpop.f32.mrf.mxu0
        %v2223 = vadd.f32 %v2174, %v2222
        %2224 = vmatmul.bf16.gmra.mxu0 %v1308
        %v2225 = vpop.f32.mrf.mxu0
        %v2226 = vadd.f32 %v2177, %v2225
        %v2227 = vpop.f32.mrf.mxu0
        %v2228 = vadd.f32 %v2179, %v2227
        %2229 = vmatmul.bf16.gmra.mxu0 %v1317
        %v2230 = vpop.f32.mrf.mxu0
        %v2231 = vadd.f32 %v2182, %v2230
        %v2232 = vpop.f32.mrf.mxu0
        %v2233 = vadd.f32 %v2184, %v2232
        %2234 = vmatmul.bf16.gmra.mxu0 %v1326
        %v2235 = vpop.f32.mrf.mxu0
        %v2236 = vadd.f32 %v2187, %v2235
        %v2237 = vpop.f32.mrf.mxu0
        %v2238 = vadd.f32 %v2189, %v2237
        %2239 = vmatmul.bf16.gmra.mxu0 %v1335
        %v2240 = vpop.f32.mrf.mxu0
        %v2241 = vadd.f32 %v2192, %v2240
        %v2242 = vpop.f32.mrf.mxu0
        %v2243 = vadd.f32 %v2194, %v2242
        %2244 = vmatmul.bf16.gmra.mxu0 %v1344
        %v2245 = vpop.f32.mrf.mxu0
        %v2246 = vadd.f32 %v2197, %v2245
        %v2247 = vpop.f32.mrf.mxu0
        %v2248 = vadd.f32 %v2199, %v2247
        %2249 = vmatmul.bf16.gmra.mxu0 %v1353
        %v2250 = vpop.f32.mrf.mxu0
        %v2251 = vadd.f32 %v2202, %v2250
        %v2252 = vpop.f32.mrf.mxu0
        %v2253 = vadd.f32 %v2204, %v2252
        %2254 = vmatmul.bf16.gmra.mxu0 %v1362
        %v2255 = vpop.f32.mrf.mxu0
        %v2256 = vadd.f32 %v2207, %v2255
        %v2257 = vpop.f32.mrf.mxu0
        %v2258 = vadd.f32 %v2209, %v2257
        %2259 = vdwg.mxu0
        %2260 = vmatpush.bf16.msra.mxu0 %v1795
        %2261 = vmatpush.bf16.msra.mxu0 %v1794
        %2262 = vmatpush.bf16.msra.mxu0 %v1793
        %2263 = vmatpush.bf16.msra.mxu0 %v1792
        %2264 = vmatpush.bf16.msra.mxu0 %v1791
        %2265 = vmatpush.bf16.msra.mxu0 %v1790
        %2266 = vmatpush.bf16.msra.mxu0 %v1789
        %2267 = vmatpush.bf16.msra.mxu0 %v1788
        %2268 = vmatmul.bf16.gmra.mxu0 %v1300
        %v2269 = vpop.f32.mrf.mxu0
        %v2270 = vadd.f32 %v2221, %v2269
        %v2271 = vpop.f32.mrf.mxu0
        %v2272 = vadd.f32 %v2223, %v2271
        %2273 = vmatmul.bf16.gmra.mxu0 %v1309
        %v2274 = vpop.f32.mrf.mxu0
        %v2275 = vadd.f32 %v2226, %v2274
        %v2276 = vpop.f32.mrf.mxu0
        %v2277 = vadd.f32 %v2228, %v2276
        %2278 = vmatmul.bf16.gmra.mxu0 %v1318
        %v2279 = vpop.f32.mrf.mxu0
        %v2280 = vadd.f32 %v2231, %v2279
        %v2281 = vpop.f32.mrf.mxu0
        %v2282 = vadd.f32 %v2233, %v2281
        %2283 = vmatmul.bf16.gmra.mxu0 %v1327
        %v2284 = vpop.f32.mrf.mxu0
        %v2285 = vadd.f32 %v2236, %v2284
        %v2286 = vpop.f32.mrf.mxu0
        %v2287 = vadd.f32 %v2238, %v2286
        %2288 = vmatmul.bf16.gmra.mxu0 %v1336
        %v2289 = vpop.f32.mrf.mxu0
        %v2290 = vadd.f32 %v2241, %v2289
        %v2291 = vpop.f32.mrf.mxu0
        %v2292 = vadd.f32 %v2243, %v2291
        %2293 = vmatmul.bf16.gmra.mxu0 %v1345
        %v2294 = vpop.f32.mrf.mxu0
        %v2295 = vadd.f32 %v2246, %v2294
        %v2296 = vpop.f32.mrf.mxu0
        %v2297 = vadd.f32 %v2248, %v2296
        %2298 = vmatmul.bf16.gmra.mxu0 %v1354
        %v2299 = vpop.f32.mrf.mxu0
        %v2300 = vadd.f32 %v2251, %v2299
        %v2301 = vpop.f32.mrf.mxu0
        %v2302 = vadd.f32 %v2253, %v2301
        %2303 = vmatmul.bf16.gmra.mxu0 %v1363
        %v2304 = vpop.f32.mrf.mxu0
        %v2305 = vadd.f32 %v2256, %v2304
        %v2306 = vpop.f32.mrf.mxu0
        %v2307 = vadd.f32 %v2258, %v2306
        %2308 = vdwg.mxu0
        %v2309 = vmax.f32 %v2270, 0.0
        %v2310 = vmax.f32 %v2272, 0.0
        %v2311 = vmax.f32 %v2275, 0.0
        %v2312 = vmax.f32 %v2277, 0.0
        %v2313 = vmax.f32 %v2280, 0.0
        %v2314 = vmax.f32 %v2282, 0.0
        %v2315 = vmax.f32 %v2285, 0.0
        %v2316 = vmax.f32 %v2287, 0.0
        %v2317 = vmax.f32 %v2290, 0.0
        %v2318 = vmax.f32 %v2292, 0.0
        %v2319 = vmax.f32 %v2295, 0.0
        %v2320 = vmax.f32 %v2297, 0.0
        %v2321 = vmax.f32 %v2300, 0.0
        %v2322 = vmax.f32 %v2302, 0.0
        %v2323 = vmax.f32 %v2305, 0.0
        %v2324 = vmax.f32 %v2307, 0.0
        %v2325 = vpack.c.bf16 %v2309, %v2309
        %v2326 = vpack.c.bf16 %v2310, %v2310
        %v2327 = vpack.c.bf16 %v2311, %v2311
        %v2328 = vpack.c.bf16 %v2312, %v2312
        %v2329 = vpack.c.bf16 %v2313, %v2313
        %v2330 = vpack.c.bf16 %v2314, %v2314
        %v2331 = vpack.c.bf16 %v2315, %v2315
        %v2332 = vpack.c.bf16 %v2316, %v2316
        %v2333 = vpack.c.bf16 %v2317, %v2317
        %v2334 = vpack.c.bf16 %v2318, %v2318
        %v2335 = vpack.c.bf16 %v2319, %v2319
        %v2336 = vpack.c.bf16 %v2320, %v2320
        %v2337 = vpack.c.bf16 %v2321, %v2321
        %v2338 = vpack.c.bf16 %v2322, %v2322
        %v2339 = vpack.c.bf16 %v2323, %v2323
        %v2340 = vpack.c.bf16 %v2324, %v2324
        %2341 = vst [vmem:[%s153] sm:$0xf] %v2325
        %2342 = vst [vmem:[%s153 + $0x4] sm:$0xf] %v2326
        %2343 = vst [vmem:[%s153 + $0x8] sm:$0xf] %v2327
        %2344 = vst [vmem:[%s153 + $0xc] sm:$0xf] %v2328
        %2345 = vst [vmem:[%s153 + $0x10] sm:$0xf] %v2329
        %2346 = vst [vmem:[%s153 + $0x14] sm:$0xf] %v2330
        %2347 = vst [vmem:[%s153 + $0x18] sm:$0xf] %v2331
        %2348 = vst [vmem:[%s153 + $0x1c] sm:$0xf] %v2332
        %2349 = vst [vmem:[%s153 + $0x20] sm:$0xf] %v2333
        %2350 = vst [vmem:[%s153 + $0x24] sm:$0xf] %v2334
        %2351 = vst [vmem:[%s153 + $0x28] sm:$0xf] %v2335
        %2352 = vst [vmem:[%s153 + $0x2c] sm:$0xf] %v2336
        %2353 = vst [vmem:[%s153 + $0x30] sm:$0xf] %v2337
        %2354 = vst [vmem:[%s153 + $0x34] sm:$0xf] %v2338
        %2355 = vst [vmem:[%s153 + $0x38] sm:$0xf] %v2339
        %2356 = vst [vmem:[%s153 + $0x3c] sm:$0xf] %v2340
        %s2357 = sand.u32 %s82, 1
        %s2358 = scalar_lea.sflag [#allocation7], %s2357
        %s2359 = sand.u32 %s82, 1
        %s2360 = smul.addr %s2359, 64
        %s2361 = scalar_lea.vmem [#allocation8], %s2360
        // Predicated region
        $region49: #{tpu_custom_call.1} parent=27 // pred_check
          %p2362 = pneg %p92
        $region50: #{tpu_custom_call.1} parent=27 // pred_check_branch
          %2364 = sbr.rel (%p2362) target = $region52
        $region51: #{tpu_custom_call.1} parent=27 // pred_region
          %s2365 = smul.u32 8, %s23
          %2367 = vsyncadd %s2358, 0
          %s2368 = smul.addr %s2365, 2
          %s2369 = smul.addr %s22, 32
          %s2370 = sadd.s32 %s2368, %s2369
          %s2371 = smul.addr %s2370, 4
          %s2372 = scalar_lea.hbm %s3, %s2371
          %s2373 = sshll.u32 %s2361, 4
          %s2374 = int_to_ptr.vmem [resolvable:$true] %s2373
          %s2375 = sshll.u32 %s2372, 4
          %s2376 = int_to_ptr.hbm [resolvable:$true] %s2375
          %2381 = dma.vmem_to_hbm [thread:$0]  %s2374, 1024, %s2376, %s2358, 64, 64, 4
        $region52: #{tpu_custom_call.1} parent=27 // pred_fallthru
          _
      $region28: #{tpu_custom_call.1} parent=5 // pred_fallthru
        _
      %p2382 = scmp.le.s32.totalorder 2, %s13
      // Predicated region
      $region53: #{tpu_custom_call.1} parent=5 // pred_check
        %p2383 = pneg %p2382
      $region54: #{tpu_custom_call.1} parent=5 // pred_check_branch
        %2385 = sbr.rel (%p2383) target = $region56
      $region55: #{tpu_custom_call.1} parent=5 // pred_region
        %s2386 = ssub.s32 %s13, 2
        // Predicated region
        $region57: #{tpu_custom_call.1} parent=55 // pred_check
          %p2387 = pneg %p98
        $region58: #{tpu_custom_call.1} parent=55 // pred_check_branch
          %2389 = sbr.rel (%p2387) target = $region60
        $region59: #{tpu_custom_call.1} parent=55 // pred_region
          %s2390 = sand.u32 %s83, 1
          %s2391 = scalar_lea.sflag [#allocation7], %s2390
          %s2392 = sand.u32 %s83, 1
          %s2393 = smul.addr %s2392, 64
          %s2394 = scalar_lea.vmem [#allocation8], %s2393
          %2396 = dma.done %s2391, 1024
        $region60: #{tpu_custom_call.1} parent=55 // pred_fallthru
          _
      $region56: #{tpu_custom_call.1} parent=5 // pred_fallthru
        _
    $region6: #{tpu_custom_call.1} parent=1 // loop_footer
      %s17 = sadd.s32 1, %s13
    $region7: #{tpu_custom_call.1} parent=1 // loop_footer_branch
      %12 = sbr.rel target = $region3
    $region8: #{tpu_custom_call.1} parent=1 // loop_exit
      _
    %2397 = vsyncpa [#allocation6], 1
    %s2398 = scalar_lea.sflag [#allocation6], 1
    %2399 = vsyncpa %s2398, 1
    %2400 = vsyncpa [#allocation7], 1
    %s2401 = scalar_lea.sflag [#allocation7], 1
    %2402 = vsyncpa %s2401, 1
  %2403 = vsyncmov [#allocation4]
  %s2404 = vpop.sfrf %2403
  %p2405 = scmp.eq.s32.totalorder %s2404, 0
  %p2406 = pneg %p2405
  %2408 = shalt.err (%p2406)
  %s2409 = scalar_lea.sflag [#allocation4], 1
  %2410 = vsyncmov %s2409
  %s2411 = vpop.sfrf %2410
  %p2412 = scmp.eq.s32.totalorder %s2411, 0
  %p2413 = pneg %p2412
  %2415 = shalt.err (%p2413)

</llo_original>
